<compile_context>
chip_gen: v5e
topology: v5e:2x2
jax: 0.10.0
libtpu: 0.0.40
codegen_flags: <defaults>
</compile_context>

<pallas_src>
import functools
import math

import numpy as np

import jax
import jax.numpy as jnp
from jax import lax
from jax.experimental import pallas as pl
from jax.experimental.pallas import tpu as pltpu


def _round_up(x, m):
    return ((x + m - 1) // m) * m


# ----------------------------------------------------------------------------
# Operator construction (numpy, cached -> built once per shape, not per call).
# ----------------------------------------------------------------------------
def _np_interp_matrix(in_size, out_size):
    """A @ v == 1-D bilinear upsample of v with align_corners=True (PyTorch)."""
    scale = 0.0 if out_size <= 1 else (in_size - 1) / (out_size - 1)
    j = np.arange(out_size, dtype=np.float32)
    src = j * np.float32(scale)
    i0 = np.clip(np.floor(src).astype(np.int64), 0, in_size - 1)
    i1 = np.clip(i0 + 1, 0, in_size - 1)
    frac = (src - i0).astype(np.float32)
    a = np.zeros((out_size, in_size), np.float32)
    rows = np.arange(out_size)
    a[rows, i0] += (1.0 - frac)
    a[rows, i1] += frac
    return a


@functools.lru_cache(maxsize=None)
def _build_operator(h, w, ksize, padding, lpad):
    """Fused (bilinear x2 upsample + conv zero-pad) operator, shape (H*W, LPAD)."""
    ah = _np_interp_matrix(h, 2 * h)       # (Ho, H)
    aw = _np_interp_matrix(w, 2 * w)       # (Wo, W)
    if padding:
        ah = np.pad(ah, ((padding, padding), (0, 0)))   # zero rows == conv zero pad
        aw = np.pad(aw, ((padding, padding), (0, 0)))
    hp, wp = ah.shape[0], aw.shape[0]
    # Mt[h*W + w, hp*Wp + wp] = ah[hp, h] * aw[wp, w]
    mt = np.einsum('ph,qw->hwpq', ah, aw).reshape(h * w, hp * wp).astype(np.float32)
    full = np.zeros((h * w, lpad), np.float32)          # zero tail: junk cols stay 0
    full[:, :hp * wp] = mt
    return jnp.asarray(full)                            # cached on device


# ----------------------------------------------------------------------------
# Pallas kernel.
# ----------------------------------------------------------------------------
def _deconv_kernel(x_ref, mt_ref, w_ref, b_ref, o_ref, *, bn, c_in, ksize, wp, sout):
    # x_ref:  (BN, C_in, H*W)          batch block, spatial flattened
    # mt_ref: (H*W, LPAD)              fused upsample+pad operator (constant)
    # w_ref:  (C_out, k*k*C_in)        conv weights packed tap-major, channel-minor
    # b_ref:  (C_out, 1)
    # o_ref:  (BN, C_out, SOUT)        lane-dense flat output (row-major Hp x Wp)
    hw = x_ref.shape[2]

    # Collapse (BN, C_in) -> sublanes; free for BN == 1, cheap relayout otherwise.
    x_all = x_ref[...].reshape(bn * c_in, hw)

    # Bilinear x2 upsample (align_corners=True) + zero padding for every channel of
    # every image in the block with ONE MXU matmul (K = H*W).
    up = jnp.dot(x_all, mt_ref[...],
                 preferred_element_type=jnp.float32)      # (BN*C_in, LPAD)

    w_all = w_ref[...]                                    # (C_out, k*k*C_in)
    b = b_ref[...]                                        # (C_out, 1)
    offsets = [kh * wp + kw for kh in range(ksize) for kw in range(ksize)]

    for n in range(bn):                                   # static unroll, BN is small
        u = up[n * c_in:(n + 1) * c_in, :]                # (C_in, LPAD)
        # im2col: stack the k*k shifted windows along sublanes once (tap-major,
        # channel-minor ordering, matching the packed weights).  Columns past the
        # valid output window pick up junk/zeros and are sliced away in the wrapper.
        win = jnp.concatenate([u[:, s:s + sout] for s in offsets],
                              axis=0)                     # (k*k*C_in, SOUT)
        # Whole conv for this image as a single K = k*k*C_in matmul + bias broadcast.
        out_n = jnp.dot(w_all, win,
                        preferred_element_type=jnp.float32) + b
        o_ref[n, :, :] = out_n.astype(o_ref.dtype)


# ----------------------------------------------------------------------------
# Wrapper.
# ----------------------------------------------------------------------------
def deconv_forward(x, weight, bias, *, ksize=3, padding=0):
    """Pallas implementation of deconv.forward (bilinear x2 upsample + Conv2d)."""
    N, C_in, H, W = x.shape
    C_out = weight.shape[0]
    in_dtype = x.dtype

    Ho, Wo = 2 * H, 2 * W
    Hp, Wp = Ho + 2 * padding, Wo + 2 * padding
    Hout, Wout = Hp - (ksize - 1), Wp - (ksize - 1)

    SOUT = _round_up(Hp * Wp, 128)                       # lane-dense flat output width
    LPAD = _round_up(SOUT + (ksize - 1) * (Wp + 1), 128)  # tap windows stay in-bounds

    mt = _build_operator(H, W, ksize, padding, LPAD)      # (H*W, LPAD), cached

    # Batch blocking: BN images per grid step; keep >= 2 grid steps when N >= 2 so
    # both v7x TensorCores get work; cap BN to keep blocks small.
    if N >= 2:
        BN = min(8, (N + 1) // 2)
    else:
        BN = 1
    grid_n = -(-N // BN)
    N_pad = BN * grid_n
    if N_pad > N:
        x = jnp.concatenate(
            [x, jnp.zeros((N_pad - N, C_in, H, W), x.dtype)], axis=0)

    x3 = x.reshape(N_pad, C_in, H * W).astype(jnp.float32)
    # w_all[co, (kh*k + kw)*C_in + ci] = weight[co, ci, kh, kw]
    w_all = jnp.transpose(weight, (0, 2, 3, 1)).reshape(
        C_out, ksize * ksize * C_in).astype(jnp.float32)
    b_r = bias.reshape(C_out, 1).astype(jnp.float32)

    kernel = functools.partial(_deconv_kernel, bn=BN, c_in=C_in, ksize=ksize,
                               wp=Wp, sout=SOUT)

    out = pl.pallas_call(
        kernel,
        out_shape=jax.ShapeDtypeStruct((N_pad, C_out, SOUT), in_dtype),
        grid_spec=pltpu.PrefetchScalarGridSpec(
            num_scalar_prefetch=0,
            grid=(grid_n,),
            in_specs=[
                pl.BlockSpec((BN, C_in, H * W), lambda b: (b, 0, 0)),
                # Constant index_maps: fetched once for the whole grid.  At larger
                # shapes single-buffer these (pl.Buffered(1) / manual DMA) on v7x.
                pl.BlockSpec((H * W, LPAD), lambda b: (0, 0)),
                pl.BlockSpec((C_out, ksize * ksize * C_in), lambda b: (0, 0)),
                pl.BlockSpec((C_out, 1), lambda b: (0, 0)),
            ],
            out_specs=pl.BlockSpec((BN, C_out, SOUT), lambda b: (b, 0, 0)),
        ),
        compiler_params=pltpu.CompilerParams(
            dimension_semantics=("parallel",),            # shards N over v7x's 2 TCs
            vmem_limit_bytes=32 * 1024 * 1024),
    )(x3, mt, w_all, b_r)

    # Drop junk columns / padded rows and restore NCHW.
    out = out[:N, :, :Hp * Wp].reshape(N, C_out, Hp, Wp)
    return out[:, :, :Hout, :Wout]


# ----------------------------------------------------------------------------
# Self-test.
# ----------------------------------------------------------------------------
def _interp_matrix_ref(in_size, out_size):
    scale = 0.0 if out_size <= 1 else (in_size - 1) / (out_size - 1)
    j = jnp.arange(out_size, dtype=jnp.float32)
    src = j * scale
    i0 = jnp.clip(jnp.floor(src).astype(jnp.int32), 0, in_size - 1)
    i1 = jnp.clip(i0 + 1, 0, in_size - 1)
    frac = src - i0.astype(jnp.float32)
    return ((1.0 - frac)[:, None] * jax.nn.one_hot(i0, in_size, dtype=jnp.float32)
            + frac[:, None] * jax.nn.one_hot(i1, in_size, dtype=jnp.float32))


if __name__ == "__main__":
    key = jax.random.PRNGKey(0)
    kx, kw, kb = jax.random.split(key, 3)

    # deconv(input_channel=4, output_channel=8, kernel_size=3, padding=0)
    N, C_in, H, W = 2, 4, 16, 16
    C_out, ksize, padding = 8, 3, 0

    x = jax.random.normal(kx, (N, C_in, H, W), jnp.float32)
    fan_in = C_in * ksize * ksize
    bound = 1.0 / math.sqrt(fan_in)   # PyTorch Conv2d default init range
    weight = jax.random.uniform(kw, (C_out, C_in, ksize, ksize), jnp.float32,
                                minval=-bound, maxval=bound)
    bias = jax.random.uniform(kb, (C_out,), jnp.float32,
                              minval=-bound, maxval=bound)

    out = deconv_forward(x, weight, bias, ksize=ksize, padding=padding)
    out = jax.block_until_ready(out)

    # ---- plain-JAX reference (same semantics as the PyTorch module) ----
    ah_ref = _interp_matrix_ref(H, 2 * H)
    aw_ref = _interp_matrix_ref(W, 2 * W)
    up = jnp.einsum('oh,nchw,pw->ncop', ah_ref, x, aw_ref,
                    precision=lax.Precision.HIGHEST)
    ref = lax.conv_general_dilated(
        up, weight, window_strides=(1, 1),
        padding=[(padding, padding), (padding, padding)],
        dimension_numbers=('NCHW', 'OIHW', 'NCHW'),
        precision=lax.Precision.HIGHEST)
    ref = ref + bias[None, :, None, None]

    assert out.shape == ref.shape, (out.shape, ref.shape)
    assert jnp.allclose(out, ref, atol=1e-3, rtol=1e-3), (
        float(jnp.max(jnp.abs(out - ref))))
    print("KERNEL_OK")
</pallas_src>

<mosaic_0001>
module attributes {stable_mosaic.version = 11 : i64} {
  func.func @_deconv_kernel(%arg0: i32, %arg1: memref<1x4x256xf32, #tpu.memory_space<vmem>>, %arg2: memref<256x1152xf32, #tpu.memory_space<vmem>>, %arg3: memref<8x36xf32, #tpu.memory_space<vmem>>, %arg4: memref<8x1xf32, #tpu.memory_space<vmem>>, %arg5: memref<1x8x1024xf32, #tpu.memory_space<vmem>>) attributes {dimension_semantics = [#tpu.dimension_semantics<parallel>], iteration_bounds = array<i64: 2>, scalar_prefetch = 0 : i64, scratch_operands = 0 : i64, tpu.core_type = #tpu.core_type<tc>, window_params = [{transform_indices = @transform_0, window_bounds = array<i64: 1, 4, 256>}, {pipeline_mode = #tpu.pipeline_mode<synchronous>, transform_indices = @transform_1, window_bounds = array<i64: 256, 1152>}, {pipeline_mode = #tpu.pipeline_mode<synchronous>, transform_indices = @transform_2, window_bounds = array<i64: 8, 36>}, {pipeline_mode = #tpu.pipeline_mode<synchronous>, transform_indices = @transform_3, window_bounds = array<i64: 8, 1>}, {transform_indices = @transform_4, window_bounds = array<i64: 1, 8, 1024>}]} {
    %c0 = arith.constant 0 : index
    %c0_0 = arith.constant 0 : index
    %c0_1 = arith.constant 0 : index
    %0 = vector.load %arg1[%c0, %c0_0, %c0_1] : memref<1x4x256xf32, #tpu.memory_space<vmem>>, vector<1x4x256xf32>
    %1 = vector.shape_cast %0 : vector<1x4x256xf32> to vector<4x256xf32>
    %c0_2 = arith.constant 0 : index
    %c0_3 = arith.constant 0 : index
    %2 = vector.load %arg2[%c0_2, %c0_3] : memref<256x1152xf32, #tpu.memory_space<vmem>>, vector<256x1152xf32>
    %cst = arith.constant dense<0.000000e+00> : vector<4x1152xf32>
    %3 = tpu.matmul %1, %2, %cst {dimension_numbers = #tpu.dot_dimension_numbers<[1], [0], [0], [1], [0, 0, 1, 1], [], []>} : vector<4x256xf32>, vector<256x1152xf32>, vector<4x1152xf32> -> vector<4x1152xf32>
    %c0_4 = arith.constant 0 : index
    %c0_5 = arith.constant 0 : index
    %4 = vector.load %arg3[%c0_4, %c0_5] : memref<8x36xf32, #tpu.memory_space<vmem>>, vector<8x36xf32>
    %c0_6 = arith.constant 0 : index
    %c0_7 = arith.constant 0 : index
    %5 = vector.load %arg4[%c0_6, %c0_7] : memref<8x1xf32, #tpu.memory_space<vmem>>, vector<8x1xf32>
    %6 = vector.extract_strided_slice %3 {offsets = [0, 0], sizes = [4, 1024], strides = [1, 1]} : vector<4x1152xf32> to vector<4x1024xf32>
    %7 = vector.extract_strided_slice %3 {offsets = [0, 1], sizes = [4, 1024], strides = [1, 1]} : vector<4x1152xf32> to vector<4x1024xf32>
    %8 = vector.extract_strided_slice %3 {offsets = [0, 2], sizes = [4, 1024], strides = [1, 1]} : vector<4x1152xf32> to vector<4x1024xf32>
    %9 = vector.extract_strided_slice %3 {offsets = [0, 32], sizes = [4, 1024], strides = [1, 1]} : vector<4x1152xf32> to vector<4x1024xf32>
    %10 = vector.extract_strided_slice %3 {offsets = [0, 33], sizes = [4, 1024], strides = [1, 1]} : vector<4x1152xf32> to vector<4x1024xf32>
    %11 = vector.extract_strided_slice %3 {offsets = [0, 34], sizes = [4, 1024], strides = [1, 1]} : vector<4x1152xf32> to vector<4x1024xf32>
    %12 = vector.extract_strided_slice %3 {offsets = [0, 64], sizes = [4, 1024], strides = [1, 1]} : vector<4x1152xf32> to vector<4x1024xf32>
    %13 = vector.extract_strided_slice %3 {offsets = [0, 65], sizes = [4, 1024], strides = [1, 1]} : vector<4x1152xf32> to vector<4x1024xf32>
    %14 = vector.extract_strided_slice %3 {offsets = [0, 66], sizes = [4, 1024], strides = [1, 1]} : vector<4x1152xf32> to vector<4x1024xf32>
    %15 = tpu.concatenate %6, %7, %8, %9, %10, %11, %12, %13, %14 in 0 : vector<4x1024xf32>, vector<4x1024xf32>, vector<4x1024xf32>, vector<4x1024xf32>, vector<4x1024xf32>, vector<4x1024xf32>, vector<4x1024xf32>, vector<4x1024xf32>, vector<4x1024xf32> -> vector<36x1024xf32>
    %cst_8 = arith.constant dense<0.000000e+00> : vector<8x1024xf32>
    %16 = tpu.matmul %4, %15, %cst_8 {dimension_numbers = #tpu.dot_dimension_numbers<[1], [0], [0], [1], [0, 0, 1, 1], [], []>} : vector<8x36xf32>, vector<36x1024xf32>, vector<8x1024xf32> -> vector<8x1024xf32>
    %17 = vector.broadcast %5 : vector<8x1xf32> to vector<8x1024xf32>
    %18 = arith.addf %16, %17 : vector<8x1024xf32>
    %c0_9 = arith.constant 0 : index
    %c0_10 = arith.constant 0 : index
    %c0_11 = arith.constant 0 : index
    %19 = vector.load %arg5[%c0_9, %c0_10, %c0_11] : memref<1x8x1024xf32, #tpu.memory_space<vmem>>, vector<1x8x1024xf32>
    %20 = vector.shape_cast %19 : vector<1x8x1024xf32> to vector<8x1024xf32>
    %21 = vector.shape_cast %18 : vector<8x1024xf32> to vector<1x8x1024xf32>
    tpu.vector_store %arg5[%c0_9, %c0_10, %c0_11], %21 {strides = array<i32>} : memref<1x8x1024xf32, #tpu.memory_space<vmem>>, vector<1x8x1024xf32>,
    return
  }
  func.func @transform_0(%arg0: i32) -> (i32, i32, i32) {
    %c0_i32 = arith.constant 0 : i32
    %c0_i32_0 = arith.constant 0 : i32
    %c0_i32_1 = arith.constant 0 : i32
    return %arg0, %c0_i32, %c0_i32_0 : i32, i32, i32
  }
  func.func @transform_1(%arg0: i32) -> (i32, i32) {
    %c0_i32 = arith.constant 0 : i32
    %c0_i32_0 = arith.constant 0 : i32
    %c0_i32_1 = arith.constant 0 : i32
    return %c0_i32, %c0_i32_0 : i32, i32
  }
  func.func @transform_2(%arg0: i32) -> (i32, i32) {
    %c0_i32 = arith.constant 0 : i32
    %c0_i32_0 = arith.constant 0 : i32
    %c0_i32_1 = arith.constant 0 : i32
    return %c0_i32, %c0_i32_0 : i32, i32
  }
  func.func @transform_3(%arg0: i32) -> (i32, i32) {
    %c0_i32 = arith.constant 0 : i32
    %c0_i32_0 = arith.constant 0 : i32
    %c0_i32_1 = arith.constant 0 : i32
    return %c0_i32, %c0_i32_0 : i32, i32
  }
  func.func @transform_4(%arg0: i32) -> (i32, i32, i32) {
    %c0_i32 = arith.constant 0 : i32
    %c0_i32_0 = arith.constant 0 : i32
    %c0_i32_1 = arith.constant 0 : i32
    return %arg0, %c0_i32, %c0_i32_0 : i32, i32, i32
  }
}

</mosaic_0001>

<llo_original>
// kernel: tpu_custom_call.1
$region0: #{tpu_custom_call.1}
  #allocation0 [shape = 'u32[]', space=smem, size = 0x4, offset = 0x4, fixed_abs, tag = 'smem constant byte address 0x4 - core index']
  #allocation1 [shape = 'u32[72,128]{1,0:T(1,128)}', space=vmem, size = 0x9000, scoped, tag = 'internal scratch']
  %s0 = inlined_call_operand.hbm [shape: f32[2,4,256], index: 0, kind: input, shape index: {}]
  %s1 = inlined_call_operand.hbm [shape: f32[256,1152], index: 1, kind: input, shape index: {}]
  %s2 = inlined_call_operand.hbm [shape: f32[8,36], index: 2, kind: input, shape index: {}]
  %s3 = inlined_call_operand.vmem [shape: f32[8,1], index: 3, kind: input, shape index: {}]
  %s4 = inlined_call_operand.hbm [shape: f32[2,8,1024], index: 4, kind: output, shape index: {}]
  %s5 = sld [smem:[#allocation0]]
  $region61: #{tpu_custom_call.1} parent=0
    _
  %s7 = ssub.s32 1, %s5
  %s8 = scalar_select 0, %s7, %s5
  $region1: #{tpu_custom_call.1} parent=0
    #allocation2 [shape = 'u8[8192]{0}', space=vmem, size = 0x2000, scoped, tag = 'input window, operand 0']
    #allocation3 [shape = 's32[2]{0}', space=sflag, size = 0x8, scoped, tag = 'scoped memory for tpu_custom_call.1']
    #allocation4 [shape = 's32[2]{0}', space=sflag, size = 0x8, scoped, tag = 'scoped memory for tpu_custom_call.1']
    #allocation5 [shape = 'u8[1179648]{0}', space=vmem, size = 0x120000, scoped, tag = 'input window, operand 1, single buffered']
    #allocation6 [shape = 's32[1]{0}', space=sflag, size = 0x4, scoped, tag = 'scoped memory for tpu_custom_call.1']
    #allocation7 [shape = 'u8[4096]{0}', space=vmem, size = 0x1000, scoped, tag = 'input window, operand 2, single buffered']
    #allocation8 [shape = 'u8[65536]{0}', space=vmem, size = 0x10000, scoped, tag = 'output window, operand 0']
    %9 = vsyncpa [#allocation3], 0
    %s10 = scalar_lea.sflag [#allocation3], 1
    %11 = vsyncpa %s10, 0
    %12 = vsyncpa [#allocation6], 0
    %13 = vsyncpa [#allocation4], 0
    %s14 = scalar_lea.sflag [#allocation4], 1
    %15 = vsyncpa %s14, 0
    loop: start=0, step=1, limit=4
    $region2: #{tpu_custom_call.1} parent=1 // loop_pre_header
      _
    $region3: #{tpu_custom_call.1} parent=1 // loop_header
      %s17 = sphi 0, %s21
      %p18 = scmp.ge.s32.totalorder %s17, 4
      %s27 = sphi 0, %s29
      %s30 = sphi 0, %s27
      %s31 = sphi 0, %s30
      %s47 = sphi 0, %s31
      %s51 = sphi 0, %s51
      %s53 = sphi 0, %s51
      %s54 = sphi 0, %s53
      %s68 = sphi 0, %s54
      %s72 = sphi 0, %s72
      %s74 = sphi 0, %s72
      %s75 = sphi 0, %s74
      %s89 = sphi 0, %s75
      %s93 = sphi 0, %s93
      %s95 = sphi 0, %s93
      %s96 = sphi 0, %s95
      %s110 = sphi 0, %s96
      %s116 = sphi 0, %s118
      %s119 = sphi 0, %s116
      %s120 = sphi 0, %s119
      %s136 = sphi 0, %s120
    $region4: #{tpu_custom_call.1} parent=1 // loop_header_branch
      %20 = sbr.rel (%p18) target = $region8
    $region5: #{tpu_custom_call.1} parent=1 // loop_body
      %s22 = ssub.s32 %s17, 1
      %s23 = ssub.s32 %s17, 2
      %s24 = sadd.s32 %s17, 1
      %s25 = ssub.s32 %s17, %s24
      %p26 = scmp.eq.s32.totalorder %s25, 0
      %s28 = sadd.s32 %s27, 1
      %s29 = scalar_select %p26, %s27, %s28
      %p32 = pneg %p26
      %p33 = scmp.eq.s32.totalorder %s17, 1
      %p34 = por %p32, %p33
      %p35 = scmp.ne.s32.totalorder %s27, %s30
      %p36 = scmp.eq.s32.totalorder %s17, 0
      %p37 = por %p35, %p36
      %p38 = scmp.ne.s32.totalorder %s27, %s30
      %p39 = scmp.eq.s32.totalorder %s22, 1
      %p40 = por %p38, %p39
      %p41 = scmp.ne.s32.totalorder %s30, %s31
      %p42 = scmp.eq.s32.totalorder %s22, 0
      %p43 = por %p41, %p42
      %p44 = scmp.ne.s32.totalorder %s30, %s31
      %p45 = scmp.eq.s32.totalorder %s23, 1
      %p46 = por %p44, %p45
      %p48 = scmp.ne.s32.totalorder %s31, %s47
      %p49 = scmp.eq.s32.totalorder %s23, 0
      %p50 = por %p48, %p49
      %s52 = sadd.s32 %s51, 1
      %p55 = scmp.eq.s32.totalorder %s17, 1
      %p56 = scmp.ne.s32.totalorder %s51, %s53
      %p57 = scmp.eq.s32.totalorder %s17, 0
      %p58 = por %p56, %p57
      %p59 = scmp.ne.s32.totalorder %s51, %s53
      %p60 = scmp.eq.s32.totalorder %s22, 1
      %p61 = por %p59, %p60
      %p62 = scmp.ne.s32.totalorder %s53, %s54
      %p63 = scmp.eq.s32.totalorder %s22, 0
      %p64 = por %p62, %p63
      %p65 = scmp.ne.s32.totalorder %s53, %s54
      %p66 = scmp.eq.s32.totalorder %s23, 1
      %p67 = por %p65, %p66
      %p69 = scmp.ne.s32.totalorder %s54, %s68
      %p70 = scmp.eq.s32.totalorder %s23, 0
      %p71 = por %p69, %p70
      %s73 = sadd.s32 %s72, 1
      %p76 = scmp.eq.s32.totalorder %s17, 1
      %p77 = scmp.ne.s32.totalorder %s72, %s74
      %p78 = scmp.eq.s32.totalorder %s17, 0
      %p79 = por %p77, %p78
      %p80 = scmp.ne.s32.totalorder %s72, %s74
      %p81 = scmp.eq.s32.totalorder %s22, 1
      %p82 = por %p80, %p81
      %p83 = scmp.ne.s32.totalorder %s74, %s75
      %p84 = scmp.eq.s32.totalorder %s22, 0
      %p85 = por %p83, %p84
      %p86 = scmp.ne.s32.totalorder %s74, %s75
      %p87 = scmp.eq.s32.totalorder %s23, 1
      %p88 = por %p86, %p87
      %p90 = scmp.ne.s32.totalorder %s75, %s89
      %p91 = scmp.eq.s32.totalorder %s23, 0
      %p92 = por %p90, %p91
      %s94 = sadd.s32 %s93, 1
      %p97 = scmp.eq.s32.totalorder %s17, 1
      %p98 = scmp.ne.s32.totalorder %s93, %s95
      %p99 = scmp.eq.s32.totalorder %s17, 0
      %p100 = por %p98, %p99
      %p101 = scmp.ne.s32.totalorder %s93, %s95
      %p102 = scmp.eq.s32.totalorder %s22, 1
      %p103 = por %p101, %p102
      %p104 = scmp.ne.s32.totalorder %s95, %s96
      %p105 = scmp.eq.s32.totalorder %s22, 0
      %p106 = por %p104, %p105
      %p107 = scmp.ne.s32.totalorder %s95, %s96
      %p108 = scmp.eq.s32.totalorder %s23, 1
      %p109 = por %p107, %p108
      %p111 = scmp.ne.s32.totalorder %s96, %s110
      %p112 = scmp.eq.s32.totalorder %s23, 0
      %p113 = por %p111, %p112
      %s114 = ssub.s32 %s17, %s24
      %p115 = scmp.eq.s32.totalorder %s114, 0
      %s117 = sadd.s32 %s116, 1
      %s118 = scalar_select %p115, %s116, %s117
      %p121 = pneg %p115
      %p122 = scmp.eq.s32.totalorder %s17, 1
      %p123 = por %p121, %p122
      %p124 = scmp.ne.s32.totalorder %s116, %s119
      %p125 = scmp.eq.s32.totalorder %s17, 0
      %p126 = por %p124, %p125
      %p127 = scmp.ne.s32.totalorder %s116, %s119
      %p128 = scmp.eq.s32.totalorder %s22, 1
      %p129 = por %p127, %p128
      %p130 = scmp.ne.s32.totalorder %s119, %s120
      %p131 = scmp.eq.s32.totalorder %s22, 0
      %p132 = por %p130, %p131
      %p133 = scmp.ne.s32.totalorder %s119, %s120
      %p134 = scmp.eq.s32.totalorder %s23, 1
      %p135 = por %p133, %p134
      %p137 = scmp.ne.s32.totalorder %s120, %s136
      %p138 = scmp.eq.s32.totalorder %s23, 0
      %p139 = por %p137, %p138
      %p140 = scmp.le.s32.totalorder 1, %s17
      %p141 = scmp.lt.s32.totalorder %s17, 3
      %p142 = pnand %p140, %p141
      %p143 = pneg %p142
      // Predicated region
      $region9: #{tpu_custom_call.1} parent=5 // pred_check
        _
      $region10: #{tpu_custom_call.1} parent=5 // pred_check_branch
        %145 = sbr.rel (%p142) target = $region12
      $region11: #{tpu_custom_call.1} parent=5 // pred_region
        %s146 = ssub.s32 %s17, 1
        // Predicated region
        $region13: #{tpu_custom_call.1} parent=11 // pred_check
          %p147 = pneg %p64
        $region14: #{tpu_custom_call.1} parent=11 // pred_check_branch
          %149 = sbr.rel (%p147) target = $region16
        $region15: #{tpu_custom_call.1} parent=11 // pred_region
          %151 = vsyncadd [#allocation6], 0
          %s152 = sshll.u32 %s1, 4
          %s153 = int_to_ptr.hbm [resolvable:$true] %s152
          %s154 = sshll.u32 [#allocation5], 4
          %s155 = int_to_ptr.vmem [resolvable:$true] %s154
          %160 = dma.hbm_to_vmem [thread:$0]  %s153, 36864, %s155, [#allocation6], 1152, 1152, 72
        $region16: #{tpu_custom_call.1} parent=11 // pred_fallthru
          _
        // Predicated region
        $region17: #{tpu_custom_call.1} parent=11 // pred_check
          %p161 = pneg %p85
        $region18: #{tpu_custom_call.1} parent=11 // pred_check_branch
          %163 = sbr.rel (%p161) target = $region20
        $region19: #{tpu_custom_call.1} parent=11 // pred_region
          %165 = vsyncadd [#allocation6], 0
          %s167 = sshll.u32 %s2, 4
          %s168 = int_to_ptr.hbm [resolvable:$true] %s167
          %s169 = sshll.u32 [#allocation7], 4
          %s170 = int_to_ptr.vmem [resolvable:$true] %s169
          %172 = dma.hbm_to_vmem [thread:$0]  %s168, 128, %s170, [#allocation6]
        $region20: #{tpu_custom_call.1} parent=11 // pred_fallthru
          _
        // Predicated region
        $region21: #{tpu_custom_call.1} parent=11 // pred_check
          %p173 = pneg %p106
        $region22: #{tpu_custom_call.1} parent=11 // pred_check_branch
          %175 = sbr.rel (%p173) target = $region24
        $region23: #{tpu_custom_call.1} parent=11 // pred_region
          _
        $region24: #{tpu_custom_call.1} parent=11 // pred_fallthru
          _
      $region12: #{tpu_custom_call.1} parent=5 // pred_fallthru
        _
      %p176 = scmp.lt.s32.totalorder %s17, 2
      // Predicated region
      $region25: #{tpu_custom_call.1} parent=5 // pred_check
        %p177 = pneg %p176
      $region26: #{tpu_custom_call.1} parent=5 // pred_check_branch
        %179 = sbr.rel (%p177) target = $region28
      $region27: #{tpu_custom_call.1} parent=5 // pred_region
        // Predicated region
        $region29: #{tpu_custom_call.1} parent=27 // pred_check
          %p180 = pneg %p37
        $region30: #{tpu_custom_call.1} parent=27 // pred_check_branch
          %182 = sbr.rel (%p180) target = $region32
        $region31: #{tpu_custom_call.1} parent=27 // pred_region
          %s183 = sand.u32 %s27, 1
          %s184 = scalar_lea.sflag [#allocation3], %s183
          %s185 = sand.u32 %s27, 1
          %s186 = smul.addr %s185, 8
          %s187 = scalar_lea.vmem [#allocation2], %s186
          %189 = vsyncadd %s184, 0
          %s190 = smul.addr %s17, 2
          %s191 = smul.addr %s190, 4
          %s192 = scalar_lea.hbm %s0, %s191
          %s194 = sshll.u32 %s192, 4
          %s195 = int_to_ptr.hbm [resolvable:$true] %s194
          %s196 = sshll.u32 %s187, 4
          %s197 = int_to_ptr.vmem [resolvable:$true] %s196
          %199 = dma.hbm_to_vmem [thread:$0]  %s195, 128, %s197, %s184
        $region32: #{tpu_custom_call.1} parent=27 // pred_fallthru
          _
      $region28: #{tpu_custom_call.1} parent=5 // pred_fallthru
        _
      %p200 = scmp.le.s32.totalorder 1, %s17
      %p201 = scmp.lt.s32.totalorder %s17, 3
      %p202 = pnand %p200, %p201
      %p203 = pneg %p202
      // Predicated region
      $region33: #{tpu_custom_call.1} parent=5 // pred_check
        _
      $region34: #{tpu_custom_call.1} parent=5 // pred_check_branch
        %205 = sbr.rel (%p202) target = $region36
      $region35: #{tpu_custom_call.1} parent=5 // pred_region
        %s206 = ssub.s32 %s17, 1
        %s207 = sand.u32 %s30, 1
        %s208 = scalar_lea.sflag [#allocation3], %s207
        %s209 = sand.u32 %s30, 1
        %s210 = smul.addr %s209, 8
        %s211 = scalar_lea.vmem [#allocation2], %s210
        // Predicated region
        $region37: #{tpu_custom_call.1} parent=35 // pred_check
          %p212 = pneg %p43
        $region38: #{tpu_custom_call.1} parent=35 // pred_check_branch
          %214 = sbr.rel (%p212) target = $region40
        $region39: #{tpu_custom_call.1} parent=35 // pred_region
          %216 = dma.done %s208, 128
        $region40: #{tpu_custom_call.1} parent=35 // pred_fallthru
          _
        // Predicated region
        $region41: #{tpu_custom_call.1} parent=35 // pred_check
          %p217 = pneg %p64
        $region42: #{tpu_custom_call.1} parent=35 // pred_check_branch
          %219 = sbr.rel (%p217) target = $region44
        $region43: #{tpu_custom_call.1} parent=35 // pred_region
          %221 = dma.done [#allocation6], 36864
        $region44: #{tpu_custom_call.1} parent=35 // pred_fallthru
          _
        // Predicated region
        $region45: #{tpu_custom_call.1} parent=35 // pred_check
          %p222 = pneg %p85
        $region46: #{tpu_custom_call.1} parent=35 // pred_check_branch
          %224 = sbr.rel (%p222) target = $region48
        $region47: #{tpu_custom_call.1} parent=35 // pred_region
          %226 = dma.done [#allocation6], 128
        $region48: #{tpu_custom_call.1} parent=35 // pred_fallthru
          _
        %s227 = sand.u32 %s30, 1
        %s228 = scalar_lea.sflag [#allocation3], %s227
        %s229 = sand.u32 %s30, 1
        %s230 = smul.addr %s229, 8
        %s231 = scalar_lea.vmem [#allocation2], %s230
        %p232 = pneg %p43
        %p233 = pneg %p40
        %p234 = pneg %p64
        %p235 = pneg %p61
        %p236 = pneg %p85
        %p237 = pneg %p82
        %p238 = pneg %p106
        %p239 = pneg %p103
        %p240 = pneg %p132
        %p241 = pneg %p129
        %s242 = sand.u32 %s119, 1
        %s243 = scalar_lea.sflag [#allocation4], %s242
        %s244 = sand.u32 %s119, 1
        %s245 = smul.addr %s244, 64
        %s246 = scalar_lea.vmem [#allocation8], %s245
        %v247 = vld [vmem:[%s211] sm:$0xff]
        %v248 = vld [vmem:[#allocation5] sm:$0xff]
        %v249 = vld [vmem:[#allocation5 + $0x8] sm:$0xff]
        %v250 = vld [vmem:[#allocation5 + $0x10] sm:$0xff]
        %v251 = vld [vmem:[#allocation5 + $0x18] sm:$0xff]
        %v252 = vld [vmem:[#allocation5 + $0x20] sm:$0xff]
        %v253 = vld [vmem:[#allocation5 + $0x28] sm:$0xff]
        %v254 = vld [vmem:[#allocation5 + $0x30] sm:$0xff]
        %v255 = vld [vmem:[#allocation5 + $0x38] sm:$0xff]
        %v256 = vld [vmem:[#allocation5 + $0x40] sm:$0xff]
        %v257 = vld [vmem:[#allocation5 + $0x48] sm:$0xff]
        %v258 = vld [vmem:[#allocation5 + $0x50] sm:$0xff]
        %v259 = vld [vmem:[#allocation5 + $0x58] sm:$0xff]
        %v260 = vld [vmem:[#allocation5 + $0x60] sm:$0xff]
        %v261 = vld [vmem:[#allocation5 + $0x68] sm:$0xff]
        %v262 = vld [vmem:[#allocation5 + $0x70] sm:$0xff]
        %v263 = vld [vmem:[#allocation5 + $0x78] sm:$0xff]
        %v264 = vld [vmem:[#allocation5 + $0x80] sm:$0xff]
        %v265 = vld [vmem:[#allocation5 + $0x88] sm:$0xff]
        %v266 = vld [vmem:[#allocation5 + $0x90] sm:$0xff]
        %v267 = vld [vmem:[#allocation5 + $0x98] sm:$0xff]
        %v268 = vld [vmem:[#allocation5 + $0xa0] sm:$0xff]
        %v269 = vld [vmem:[#allocation5 + $0xa8] sm:$0xff]
        %v270 = vld [vmem:[#allocation5 + $0xb0] sm:$0xff]
        %v271 = vld [vmem:[#allocation5 + $0xb8] sm:$0xff]
        %v272 = vld [vmem:[#allocation5 + $0xc0] sm:$0xff]
        %v273 = vld [vmem:[#allocation5 + $0xc8] sm:$0xff]
        %v274 = vld [vmem:[#allocation5 + $0xd0] sm:$0xff]
        %v275 = vld [vmem:[#allocation5 + $0xd8] sm:$0xff]
        %v276 = vld [vmem:[#allocation5 + $0xe0] sm:$0xff]
        %v277 = vld [vmem:[#allocation5 + $0xe8] sm:$0xff]
        %v278 = vld [vmem:[#allocation5 + $0xf0] sm:$0xff]
        %v279 = vld [vmem:[#allocation5 + $0xf8] sm:$0xff]
        %v280 = vld [vmem:[#allocation5 + $0x100] sm:$0xff]
        %v281 = vld [vmem:[#allocation5 + $0x108] sm:$0xff]
        %v282 = vld [vmem:[#allocation5 + $0x110] sm:$0xff]
        %v283 = vld [vmem:[#allocation5 + $0x118] sm:$0xff]
        %v284 = vld [vmem:[#allocation5 + $0x120] sm:$0xff]
        %v285 = vld [vmem:[#allocation5 + $0x128] sm:$0xff]
        %v286 = vld [vmem:[#allocation5 + $0x130] sm:$0xff]
        %v287 = vld [vmem:[#allocation5 + $0x138] sm:$0xff]
        %v288 = vld [vmem:[#allocation5 + $0x140] sm:$0xff]
        %v289 = vld [vmem:[#allocation5 + $0x148] sm:$0xff]
        %v290 = vld [vmem:[#allocation5 + $0x150] sm:$0xff]
        %v291 = vld [vmem:[#allocation5 + $0x158] sm:$0xff]
        %v292 = vld [vmem:[#allocation5 + $0x160] sm:$0xff]
        %v293 = vld [vmem:[#allocation5 + $0x168] sm:$0xff]
        %v294 = vld [vmem:[#allocation5 + $0x170] sm:$0xff]
        %v295 = vld [vmem:[#allocation5 + $0x178] sm:$0xff]
        %v296 = vld [vmem:[#allocation5 + $0x180] sm:$0xff]
        %v297 = vld [vmem:[#allocation5 + $0x188] sm:$0xff]
        %v298 = vld [vmem:[#allocation5 + $0x190] sm:$0xff]
        %v299 = vld [vmem:[#allocation5 + $0x198] sm:$0xff]
        %v300 = vld [vmem:[#allocation5 + $0x1a0] sm:$0xff]
        %v301 = vld [vmem:[#allocation5 + $0x1a8] sm:$0xff]
        %v302 = vld [vmem:[#allocation5 + $0x1b0] sm:$0xff]
        %v303 = vld [vmem:[#allocation5 + $0x1b8] sm:$0xff]
        %v304 = vld [vmem:[#allocation5 + $0x1c0] sm:$0xff]
        %v305 = vld [vmem:[#allocation5 + $0x1c8] sm:$0xff]
        %v306 = vld [vmem:[#allocation5 + $0x1d0] sm:$0xff]
        %v307 = vld [vmem:[#allocation5 + $0x1d8] sm:$0xff]
        %v308 = vld [vmem:[#allocation5 + $0x1e0] sm:$0xff]
        %v309 = vld [vmem:[#allocation5 + $0x1e8] sm:$0xff]
        %v310 = vld [vmem:[#allocation5 + $0x1f0] sm:$0xff]
        %v311 = vld [vmem:[#allocation5 + $0x1f8] sm:$0xff]
        %v312 = vld [vmem:[#allocation5 + $0x200] sm:$0xff]
        %v313 = vld [vmem:[#allocation5 + $0x208] sm:$0xff]
        %v314 = vld [vmem:[#allocation5 + $0x210] sm:$0xff]
        %v315 = vld [vmem:[#allocation5 + $0x218] sm:$0xff]
        %v316 = vld [vmem:[#allocation5 + $0x220] sm:$0xff]
        %v317 = vld [vmem:[#allocation5 + $0x228] sm:$0xff]
        %v318 = vld [vmem:[#allocation5 + $0x230] sm:$0xff]
        %v319 = vld [vmem:[#allocation5 + $0x238] sm:$0xff]
        %v320 = vld [vmem:[#allocation5 + $0x240] sm:$0xff]
        %v321 = vld [vmem:[#allocation5 + $0x248] sm:$0xff]
        %v322 = vld [vmem:[#allocation5 + $0x250] sm:$0xff]
        %v323 = vld [vmem:[#allocation5 + $0x258] sm:$0xff]
        %v324 = vld [vmem:[#allocation5 + $0x260] sm:$0xff]
        %v325 = vld [vmem:[#allocation5 + $0x268] sm:$0xff]
        %v326 = vld [vmem:[#allocation5 + $0x270] sm:$0xff]
        %v327 = vld [vmem:[#allocation5 + $0x278] sm:$0xff]
        %v328 = vld [vmem:[#allocation5 + $0x280] sm:$0xff]
        %v329 = vld [vmem:[#allocation5 + $0x288] sm:$0xff]
        %v330 = vld [vmem:[#allocation5 + $0x290] sm:$0xff]
        %v331 = vld [vmem:[#allocation5 + $0x298] sm:$0xff]
        %v332 = vld [vmem:[#allocation5 + $0x2a0] sm:$0xff]
        %v333 = vld [vmem:[#allocation5 + $0x2a8] sm:$0xff]
        %v334 = vld [vmem:[#allocation5 + $0x2b0] sm:$0xff]
        %v335 = vld [vmem:[#allocation5 + $0x2b8] sm:$0xff]
        %v336 = vld [vmem:[#allocation5 + $0x2c0] sm:$0xff]
        %v337 = vld [vmem:[#allocation5 + $0x2c8] sm:$0xff]
        %v338 = vld [vmem:[#allocation5 + $0x2d0] sm:$0xff]
        %v339 = vld [vmem:[#allocation5 + $0x2d8] sm:$0xff]
        %v340 = vld [vmem:[#allocation5 + $0x2e0] sm:$0xff]
        %v341 = vld [vmem:[#allocation5 + $0x2e8] sm:$0xff]
        %v342 = vld [vmem:[#allocation5 + $0x2f0] sm:$0xff]
        %v343 = vld [vmem:[#allocation5 + $0x2f8] sm:$0xff]
        %v344 = vld [vmem:[#allocation5 + $0x300] sm:$0xff]
        %v345 = vld [vmem:[#allocation5 + $0x308] sm:$0xff]
        %v346 = vld [vmem:[#allocation5 + $0x310] sm:$0xff]
        %v347 = vld [vmem:[#allocation5 + $0x318] sm:$0xff]
        %v348 = vld [vmem:[#allocation5 + $0x320] sm:$0xff]
        %v349 = vld [vmem:[#allocation5 + $0x328] sm:$0xff]
        %v350 = vld [vmem:[#allocation5 + $0x330] sm:$0xff]
        %v351 = vld [vmem:[#allocation5 + $0x338] sm:$0xff]
        %v352 = vld [vmem:[#allocation5 + $0x340] sm:$0xff]
        %v353 = vld [vmem:[#allocation5 + $0x348] sm:$0xff]
        %v354 = vld [vmem:[#allocation5 + $0x350] sm:$0xff]
        %v355 = vld [vmem:[#allocation5 + $0x358] sm:$0xff]
        %v356 = vld [vmem:[#allocation5 + $0x360] sm:$0xff]
        %v357 = vld [vmem:[#allocation5 + $0x368] sm:$0xff]
        %v358 = vld [vmem:[#allocation5 + $0x370] sm:$0xff]
        %v359 = vld [vmem:[#allocation5 + $0x378] sm:$0xff]
        %v360 = vld [vmem:[#allocation5 + $0x380] sm:$0xff]
        %v361 = vld [vmem:[#allocation5 + $0x388] sm:$0xff]
        %v362 = vld [vmem:[#allocation5 + $0x390] sm:$0xff]
        %v363 = vld [vmem:[#allocation5 + $0x398] sm:$0xff]
        %v364 = vld [vmem:[#allocation5 + $0x3a0] sm:$0xff]
        %v365 = vld [vmem:[#allocation5 + $0x3a8] sm:$0xff]
        %v366 = vld [vmem:[#allocation5 + $0x3b0] sm:$0xff]
        %v367 = vld [vmem:[#allocation5 + $0x3b8] sm:$0xff]
        %v368 = vld [vmem:[#allocation5 + $0x3c0] sm:$0xff]
        %v369 = vld [vmem:[#allocation5 + $0x3c8] sm:$0xff]
        %v370 = vld [vmem:[#allocation5 + $0x3d0] sm:$0xff]
        %v371 = vld [vmem:[#allocation5 + $0x3d8] sm:$0xff]
        %v372 = vld [vmem:[#allocation5 + $0x3e0] sm:$0xff]
        %v373 = vld [vmem:[#allocation5 + $0x3e8] sm:$0xff]
        %v374 = vld [vmem:[#allocation5 + $0x3f0] sm:$0xff]
        %v375 = vld [vmem:[#allocation5 + $0x3f8] sm:$0xff]
        %v376 = vld [vmem:[#allocation5 + $0x400] sm:$0xff]
        %v377 = vld [vmem:[#allocation5 + $0x408] sm:$0xff]
        %v378 = vld [vmem:[#allocation5 + $0x410] sm:$0xff]
        %v379 = vld [vmem:[#allocation5 + $0x418] sm:$0xff]
        %v380 = vld [vmem:[#allocation5 + $0x420] sm:$0xff]
        %v381 = vld [vmem:[#allocation5 + $0x428] sm:$0xff]
        %v382 = vld [vmem:[#allocation5 + $0x430] sm:$0xff]
        %v383 = vld [vmem:[#allocation5 + $0x438] sm:$0xff]
        %v384 = vld [vmem:[#allocation5 + $0x440] sm:$0xff]
        %v385 = vld [vmem:[#allocation5 + $0x448] sm:$0xff]
        %v386 = vld [vmem:[#allocation5 + $0x450] sm:$0xff]
        %v387 = vld [vmem:[#allocation5 + $0x458] sm:$0xff]
        %v388 = vld [vmem:[#allocation5 + $0x460] sm:$0xff]
        %v389 = vld [vmem:[#allocation5 + $0x468] sm:$0xff]
        %v390 = vld [vmem:[#allocation5 + $0x470] sm:$0xff]
        %v391 = vld [vmem:[#allocation5 + $0x478] sm:$0xff]
        %v392 = vld [vmem:[#allocation5 + $0x480] sm:$0xff]
        %v393 = vld [vmem:[#allocation5 + $0x488] sm:$0xff]
        %v394 = vld [vmem:[#allocation5 + $0x490] sm:$0xff]
        %v395 = vld [vmem:[#allocation5 + $0x498] sm:$0xff]
        %v396 = vld [vmem:[#allocation5 + $0x4a0] sm:$0xff]
        %v397 = vld [vmem:[#allocation5 + $0x4a8] sm:$0xff]
        %v398 = vld [vmem:[#allocation5 + $0x4b0] sm:$0xff]
        %v399 = vld [vmem:[#allocation5 + $0x4b8] sm:$0xff]
        %v400 = vld [vmem:[#allocation5 + $0x4c0] sm:$0xff]
        %v401 = vld [vmem:[#allocation5 + $0x4c8] sm:$0xff]
        %v402 = vld [vmem:[#allocation5 + $0x4d0] sm:$0xff]
        %v403 = vld [vmem:[#allocation5 + $0x4d8] sm:$0xff]
        %v404 = vld [vmem:[#allocation5 + $0x4e0] sm:$0xff]
        %v405 = vld [vmem:[#allocation5 + $0x4e8] sm:$0xff]
        %v406 = vld [vmem:[#allocation5 + $0x4f0] sm:$0xff]
        %v407 = vld [vmem:[#allocation5 + $0x4f8] sm:$0xff]
        %v408 = vld [vmem:[#allocation5 + $0x500] sm:$0xff]
        %v409 = vld [vmem:[#allocation5 + $0x508] sm:$0xff]
        %v410 = vld [vmem:[#allocation5 + $0x510] sm:$0xff]
        %v411 = vld [vmem:[#allocation5 + $0x518] sm:$0xff]
        %v412 = vld [vmem:[#allocation5 + $0x520] sm:$0xff]
        %v413 = vld [vmem:[#allocation5 + $0x528] sm:$0xff]
        %v414 = vld [vmem:[#allocation5 + $0x530] sm:$0xff]
        %v415 = vld [vmem:[#allocation5 + $0x538] sm:$0xff]
        %v416 = vld [vmem:[#allocation5 + $0x540] sm:$0xff]
        %v417 = vld [vmem:[#allocation5 + $0x548] sm:$0xff]
        %v418 = vld [vmem:[#allocation5 + $0x550] sm:$0xff]
        %v419 = vld [vmem:[#allocation5 + $0x558] sm:$0xff]
        %v420 = vld [vmem:[#allocation5 + $0x560] sm:$0xff]
        %v421 = vld [vmem:[#allocation5 + $0x568] sm:$0xff]
        %v422 = vld [vmem:[#allocation5 + $0x570] sm:$0xff]
        %v423 = vld [vmem:[#allocation5 + $0x578] sm:$0xff]
        %v424 = vld [vmem:[#allocation5 + $0x580] sm:$0xff]
        %v425 = vld [vmem:[#allocation5 + $0x588] sm:$0xff]
        %v426 = vld [vmem:[#allocation5 + $0x590] sm:$0xff]
        %v427 = vld [vmem:[#allocation5 + $0x598] sm:$0xff]
        %v428 = vld [vmem:[#allocation5 + $0x5a0] sm:$0xff]
        %v429 = vld [vmem:[#allocation5 + $0x5a8] sm:$0xff]
        %v430 = vld [vmem:[#allocation5 + $0x5b0] sm:$0xff]
        %v431 = vld [vmem:[#allocation5 + $0x5b8] sm:$0xff]
        %v432 = vld [vmem:[#allocation5 + $0x5c0] sm:$0xff]
        %v433 = vld [vmem:[#allocation5 + $0x5c8] sm:$0xff]
        %v434 = vld [vmem:[#allocation5 + $0x5d0] sm:$0xff]
        %v435 = vld [vmem:[#allocation5 + $0x5d8] sm:$0xff]
        %v436 = vld [vmem:[#allocation5 + $0x5e0] sm:$0xff]
        %v437 = vld [vmem:[#allocation5 + $0x5e8] sm:$0xff]
        %v438 = vld [vmem:[#allocation5 + $0x5f0] sm:$0xff]
        %v439 = vld [vmem:[#allocation5 + $0x5f8] sm:$0xff]
        %v440 = vld [vmem:[#allocation5 + $0x600] sm:$0xff]
        %v441 = vld [vmem:[#allocation5 + $0x608] sm:$0xff]
        %v442 = vld [vmem:[#allocation5 + $0x610] sm:$0xff]
        %v443 = vld [vmem:[#allocation5 + $0x618] sm:$0xff]
        %v444 = vld [vmem:[#allocation5 + $0x620] sm:$0xff]
        %v445 = vld [vmem:[#allocation5 + $0x628] sm:$0xff]
        %v446 = vld [vmem:[#allocation5 + $0x630] sm:$0xff]
        %v447 = vld [vmem:[#allocation5 + $0x638] sm:$0xff]
        %v448 = vld [vmem:[#allocation5 + $0x640] sm:$0xff]
        %v449 = vld [vmem:[#allocation5 + $0x648] sm:$0xff]
        %v450 = vld [vmem:[#allocation5 + $0x650] sm:$0xff]
        %v451 = vld [vmem:[#allocation5 + $0x658] sm:$0xff]
        %v452 = vld [vmem:[#allocation5 + $0x660] sm:$0xff]
        %v453 = vld [vmem:[#allocation5 + $0x668] sm:$0xff]
        %v454 = vld [vmem:[#allocation5 + $0x670] sm:$0xff]
        %v455 = vld [vmem:[#allocation5 + $0x678] sm:$0xff]
        %v456 = vld [vmem:[#allocation5 + $0x680] sm:$0xff]
        %v457 = vld [vmem:[#allocation5 + $0x688] sm:$0xff]
        %v458 = vld [vmem:[#allocation5 + $0x690] sm:$0xff]
        %v459 = vld [vmem:[#allocation5 + $0x698] sm:$0xff]
        %v460 = vld [vmem:[#allocation5 + $0x6a0] sm:$0xff]
        %v461 = vld [vmem:[#allocation5 + $0x6a8] sm:$0xff]
        %v462 = vld [vmem:[#allocation5 + $0x6b0] sm:$0xff]
        %v463 = vld [vmem:[#allocation5 + $0x6b8] sm:$0xff]
        %v464 = vld [vmem:[#allocation5 + $0x6c0] sm:$0xff]
        %v465 = vld [vmem:[#allocation5 + $0x6c8] sm:$0xff]
        %v466 = vld [vmem:[#allocation5 + $0x6d0] sm:$0xff]
        %v467 = vld [vmem:[#allocation5 + $0x6d8] sm:$0xff]
        %v468 = vld [vmem:[#allocation5 + $0x6e0] sm:$0xff]
        %v469 = vld [vmem:[#allocation5 + $0x6e8] sm:$0xff]
        %v470 = vld [vmem:[#allocation5 + $0x6f0] sm:$0xff]
        %v471 = vld [vmem:[#allocation5 + $0x6f8] sm:$0xff]
        %v472 = vld [vmem:[#allocation5 + $0x700] sm:$0xff]
        %v473 = vld [vmem:[#allocation5 + $0x708] sm:$0xff]
        %v474 = vld [vmem:[#allocation5 + $0x710] sm:$0xff]
        %v475 = vld [vmem:[#allocation5 + $0x718] sm:$0xff]
        %v476 = vld [vmem:[#allocation5 + $0x720] sm:$0xff]
        %v477 = vld [vmem:[#allocation5 + $0x728] sm:$0xff]
        %v478 = vld [vmem:[#allocation5 + $0x730] sm:$0xff]
        %v479 = vld [vmem:[#allocation5 + $0x738] sm:$0xff]
        %v480 = vld [vmem:[#allocation5 + $0x740] sm:$0xff]
        %v481 = vld [vmem:[#allocation5 + $0x748] sm:$0xff]
        %v482 = vld [vmem:[#allocation5 + $0x750] sm:$0xff]
        %v483 = vld [vmem:[#allocation5 + $0x758] sm:$0xff]
        %v484 = vld [vmem:[#allocation5 + $0x760] sm:$0xff]
        %v485 = vld [vmem:[#allocation5 + $0x768] sm:$0xff]
        %v486 = vld [vmem:[#allocation5 + $0x770] sm:$0xff]
        %v487 = vld [vmem:[#allocation5 + $0x778] sm:$0xff]
        %v488 = vld [vmem:[#allocation5 + $0x780] sm:$0xff]
        %v489 = vld [vmem:[#allocation5 + $0x788] sm:$0xff]
        %v490 = vld [vmem:[#allocation5 + $0x790] sm:$0xff]
        %v491 = vld [vmem:[#allocation5 + $0x798] sm:$0xff]
        %v492 = vld [vmem:[#allocation5 + $0x7a0] sm:$0xff]
        %v493 = vld [vmem:[#allocation5 + $0x7a8] sm:$0xff]
        %v494 = vld [vmem:[#allocation5 + $0x7b0] sm:$0xff]
        %v495 = vld [vmem:[#allocation5 + $0x7b8] sm:$0xff]
        %v496 = vld [vmem:[#allocation5 + $0x7c0] sm:$0xff]
        %v497 = vld [vmem:[#allocation5 + $0x7c8] sm:$0xff]
        %v498 = vld [vmem:[#allocation5 + $0x7d0] sm:$0xff]
        %v499 = vld [vmem:[#allocation5 + $0x7d8] sm:$0xff]
        %v500 = vld [vmem:[#allocation5 + $0x7e0] sm:$0xff]
        %v501 = vld [vmem:[#allocation5 + $0x7e8] sm:$0xff]
        %v502 = vld [vmem:[#allocation5 + $0x7f0] sm:$0xff]
        %v503 = vld [vmem:[#allocation5 + $0x7f8] sm:$0xff]
        %v504 = vld [vmem:[#allocation5 + $0x800] sm:$0xff]
        %v505 = vld [vmem:[#allocation5 + $0x808] sm:$0xff]
        %v506 = vld [vmem:[#allocation5 + $0x810] sm:$0xff]
        %v507 = vld [vmem:[#allocation5 + $0x818] sm:$0xff]
        %v508 = vld [vmem:[#allocation5 + $0x820] sm:$0xff]
        %v509 = vld [vmem:[#allocation5 + $0x828] sm:$0xff]
        %v510 = vld [vmem:[#allocation5 + $0x830] sm:$0xff]
        %v511 = vld [vmem:[#allocation5 + $0x838] sm:$0xff]
        %v512 = vld [vmem:[#allocation5 + $0x840] sm:$0xff]
        %v513 = vld [vmem:[#allocation5 + $0x848] sm:$0xff]
        %v514 = vld [vmem:[#allocation5 + $0x850] sm:$0xff]
        %v515 = vld [vmem:[#allocation5 + $0x858] sm:$0xff]
        %v516 = vld [vmem:[#allocation5 + $0x860] sm:$0xff]
        %v517 = vld [vmem:[#allocation5 + $0x868] sm:$0xff]
        %v518 = vld [vmem:[#allocation5 + $0x870] sm:$0xff]
        %v519 = vld [vmem:[#allocation5 + $0x878] sm:$0xff]
        %v520 = vld [vmem:[#allocation5 + $0x880] sm:$0xff]
        %v521 = vld [vmem:[#allocation5 + $0x888] sm:$0xff]
        %v522 = vld [vmem:[#allocation5 + $0x890] sm:$0xff]
        %v523 = vld [vmem:[#allocation5 + $0x898] sm:$0xff]
        %v524 = vld [vmem:[#allocation5 + $0x8a0] sm:$0xff]
        %v525 = vld [vmem:[#allocation5 + $0x8a8] sm:$0xff]
        %v526 = vld [vmem:[#allocation5 + $0x8b0] sm:$0xff]
        %v527 = vld [vmem:[#allocation5 + $0x8b8] sm:$0xff]
        %v528 = vld [vmem:[#allocation5 + $0x8c0] sm:$0xff]
        %v529 = vld [vmem:[#allocation5 + $0x8c8] sm:$0xff]
        %v530 = vld [vmem:[#allocation5 + $0x8d0] sm:$0xff]
        %v531 = vld [vmem:[#allocation5 + $0x8d8] sm:$0xff]
        %v532 = vld [vmem:[#allocation5 + $0x8e0] sm:$0xff]
        %v533 = vld [vmem:[#allocation5 + $0x8e8] sm:$0xff]
        %v534 = vld [vmem:[#allocation5 + $0x8f0] sm:$0xff]
        %v535 = vld [vmem:[#allocation5 + $0x8f8] sm:$0xff]
        %537 = vst [vmem:[#allocation1] ss:$2 sm:$0xff] %v247
        %v538 = vld.sshfl [vmem:[#allocation1] sm:$0xff pattern:$0x75316420]
        %v539 = vld.sshfl [vmem:[#allocation1 + $0x8] sm:$0xff pattern:$0x75316420]
        %542 = vmatpush.msra.mxu0 %v383
        %543 = vmatpush.msra.mxu0 %v374
        %544 = vmatpush.msra.mxu0 %v365
        %545 = vmatpush.msra.mxu0 %v356
        %546 = vmatpush.msra.mxu0 %v347
        %547 = vmatpush.msra.mxu0 %v338
        %548 = vmatpush.msra.mxu0 %v329
        %549 = vmatpush.msra.mxu0 %v320
        %550 = vmatpush.msra.mxu0 %v311
        %551 = vmatpush.msra.mxu0 %v302
        %552 = vmatpush.msra.mxu0 %v293
        %553 = vmatpush.msra.mxu0 %v284
        %554 = vmatpush.msra.mxu0 %v275
        %555 = vmatpush.msra.mxu0 %v266
        %556 = vmatpush.msra.mxu0 %v257
        %557 = vmatpush.msra.mxu0 %v248
        %558 = vmatmul.f32.gmra.mxu0 %v538
        %v559 = vpop.f32.mrf.mxu0
        %v560 = vadd.f32 0.0, %v559
        %561 = vdwg.mxu0
        %562 = vmatpush.msra.mxu0 %v527
        %563 = vmatpush.msra.mxu0 %v518
        %564 = vmatpush.msra.mxu0 %v509
        %565 = vmatpush.msra.mxu0 %v500
        %566 = vmatpush.msra.mxu0 %v491
        %567 = vmatpush.msra.mxu0 %v482
        %568 = vmatpush.msra.mxu0 %v473
        %569 = vmatpush.msra.mxu0 %v464
        %570 = vmatpush.msra.mxu0 %v455
        %571 = vmatpush.msra.mxu0 %v446
        %572 = vmatpush.msra.mxu0 %v437
        %573 = vmatpush.msra.mxu0 %v428
        %574 = vmatpush.msra.mxu0 %v419
        %575 = vmatpush.msra.mxu0 %v410
        %576 = vmatpush.msra.mxu0 %v401
        %577 = vmatpush.msra.mxu0 %v392
        %578 = vmatmul.f32.gmra.mxu0 %v539
        %v579 = vpop.f32.mrf.mxu0
        %v580 = vadd.f32 %v560, %v579
        %581 = vdwg.mxu0
        %582 = vmatpush.msra.mxu0 %v384
        %583 = vmatpush.msra.mxu0 %v375
        %584 = vmatpush.msra.mxu0 %v366
        %585 = vmatpush.msra.mxu0 %v357
        %586 = vmatpush.msra.mxu0 %v348
        %587 = vmatpush.msra.mxu0 %v339
        %588 = vmatpush.msra.mxu0 %v330
        %589 = vmatpush.msra.mxu0 %v321
        %590 = vmatpush.msra.mxu0 %v312
        %591 = vmatpush.msra.mxu0 %v303
        %592 = vmatpush.msra.mxu0 %v294
        %593 = vmatpush.msra.mxu0 %v285
        %594 = vmatpush.msra.mxu0 %v276
        %595 = vmatpush.msra.mxu0 %v267
        %596 = vmatpush.msra.mxu0 %v258
        %597 = vmatpush.msra.mxu0 %v249
        %598 = vmatmul.f32.gmra.mxu0 %v538
        %v599 = vpop.f32.mrf.mxu0
        %v600 = vadd.f32 0.0, %v599
        %601 = vdwg.mxu0
        %602 = vmatpush.msra.mxu0 %v528
        %603 = vmatpush.msra.mxu0 %v519
        %604 = vmatpush.msra.mxu0 %v510
        %605 = vmatpush.msra.mxu0 %v501
        %606 = vmatpush.msra.mxu0 %v492
        %607 = vmatpush.msra.mxu0 %v483
        %608 = vmatpush.msra.mxu0 %v474
        %609 = vmatpush.msra.mxu0 %v465
        %610 = vmatpush.msra.mxu0 %v456
        %611 = vmatpush.msra.mxu0 %v447
        %612 = vmatpush.msra.mxu0 %v438
        %613 = vmatpush.msra.mxu0 %v429
        %614 = vmatpush.msra.mxu0 %v420
        %615 = vmatpush.msra.mxu0 %v411
        %616 = vmatpush.msra.mxu0 %v402
        %617 = vmatpush.msra.mxu0 %v393
        %618 = vmatmul.f32.gmra.mxu0 %v539
        %v619 = vpop.f32.mrf.mxu0
        %v620 = vadd.f32 %v600, %v619
        %621 = vdwg.mxu0
        %622 = vmatpush.msra.mxu0 %v385
        %623 = vmatpush.msra.mxu0 %v376
        %624 = vmatpush.msra.mxu0 %v367
        %625 = vmatpush.msra.mxu0 %v358
        %626 = vmatpush.msra.mxu0 %v349
        %627 = vmatpush.msra.mxu0 %v340
        %628 = vmatpush.msra.mxu0 %v331
        %629 = vmatpush.msra.mxu0 %v322
        %630 = vmatpush.msra.mxu0 %v313
        %631 = vmatpush.msra.mxu0 %v304
        %632 = vmatpush.msra.mxu0 %v295
        %633 = vmatpush.msra.mxu0 %v286
        %634 = vmatpush.msra.mxu0 %v277
        %635 = vmatpush.msra.mxu0 %v268
        %636 = vmatpush.msra.mxu0 %v259
        %637 = vmatpush.msra.mxu0 %v250
        %638 = vmatmul.f32.gmra.mxu0 %v538
        %v639 = vpop.f32.mrf.mxu0
        %v640 = vadd.f32 0.0, %v639
        %641 = vdwg.mxu0
        %642 = vmatpush.msra.mxu0 %v529
        %643 = vmatpush.msra.mxu0 %v520
        %644 = vmatpush.msra.mxu0 %v511
        %645 = vmatpush.msra.mxu0 %v502
        %646 = vmatpush.msra.mxu0 %v493
        %647 = vmatpush.msra.mxu0 %v484
        %648 = vmatpush.msra.mxu0 %v475
        %649 = vmatpush.msra.mxu0 %v466
        %650 = vmatpush.msra.mxu0 %v457
        %651 = vmatpush.msra.mxu0 %v448
        %652 = vmatpush.msra.mxu0 %v439
        %653 = vmatpush.msra.mxu0 %v430
        %654 = vmatpush.msra.mxu0 %v421
        %655 = vmatpush.msra.mxu0 %v412
        %656 = vmatpush.msra.mxu0 %v403
        %657 = vmatpush.msra.mxu0 %v394
        %658 = vmatmul.f32.gmra.mxu0 %v539
        %v659 = vpop.f32.mrf.mxu0
        %v660 = vadd.f32 %v640, %v659
        %661 = vdwg.mxu0
        %662 = vmatpush.msra.mxu0 %v386
        %663 = vmatpush.msra.mxu0 %v377
        %664 = vmatpush.msra.mxu0 %v368
        %665 = vmatpush.msra.mxu0 %v359
        %666 = vmatpush.msra.mxu0 %v350
        %667 = vmatpush.msra.mxu0 %v341
        %668 = vmatpush.msra.mxu0 %v332
        %669 = vmatpush.msra.mxu0 %v323
        %670 = vmatpush.msra.mxu0 %v314
        %671 = vmatpush.msra.mxu0 %v305
        %672 = vmatpush.msra.mxu0 %v296
        %673 = vmatpush.msra.mxu0 %v287
        %674 = vmatpush.msra.mxu0 %v278
        %675 = vmatpush.msra.mxu0 %v269
        %676 = vmatpush.msra.mxu0 %v260
        %677 = vmatpush.msra.mxu0 %v251
        %678 = vmatmul.f32.gmra.mxu0 %v538
        %v679 = vpop.f32.mrf.mxu0
        %v680 = vadd.f32 0.0, %v679
        %681 = vdwg.mxu0
        %682 = vmatpush.msra.mxu0 %v530
        %683 = vmatpush.msra.mxu0 %v521
        %684 = vmatpush.msra.mxu0 %v512
        %685 = vmatpush.msra.mxu0 %v503
        %686 = vmatpush.msra.mxu0 %v494
        %687 = vmatpush.msra.mxu0 %v485
        %688 = vmatpush.msra.mxu0 %v476
        %689 = vmatpush.msra.mxu0 %v467
        %690 = vmatpush.msra.mxu0 %v458
        %691 = vmatpush.msra.mxu0 %v449
        %692 = vmatpush.msra.mxu0 %v440
        %693 = vmatpush.msra.mxu0 %v431
        %694 = vmatpush.msra.mxu0 %v422
        %695 = vmatpush.msra.mxu0 %v413
        %696 = vmatpush.msra.mxu0 %v404
        %697 = vmatpush.msra.mxu0 %v395
        %698 = vmatmul.f32.gmra.mxu0 %v539
        %v699 = vpop.f32.mrf.mxu0
        %v700 = vadd.f32 %v680, %v699
        %701 = vdwg.mxu0
        %702 = vmatpush.msra.mxu0 %v387
        %703 = vmatpush.msra.mxu0 %v378
        %704 = vmatpush.msra.mxu0 %v369
        %705 = vmatpush.msra.mxu0 %v360
        %706 = vmatpush.msra.mxu0 %v351
        %707 = vmatpush.msra.mxu0 %v342
        %708 = vmatpush.msra.mxu0 %v333
        %709 = vmatpush.msra.mxu0 %v324
        %710 = vmatpush.msra.mxu0 %v315
        %711 = vmatpush.msra.mxu0 %v306
        %712 = vmatpush.msra.mxu0 %v297
        %713 = vmatpush.msra.mxu0 %v288
        %714 = vmatpush.msra.mxu0 %v279
        %715 = vmatpush.msra.mxu0 %v270
        %716 = vmatpush.msra.mxu0 %v261
        %717 = vmatpush.msra.mxu0 %v252
        %718 = vmatmul.f32.gmra.mxu0 %v538
        %v719 = vpop.f32.mrf.mxu0
        %v720 = vadd.f32 0.0, %v719
        %721 = vdwg.mxu0
        %722 = vmatpush.msra.mxu0 %v531
        %723 = vmatpush.msra.mxu0 %v522
        %724 = vmatpush.msra.mxu0 %v513
        %725 = vmatpush.msra.mxu0 %v504
        %726 = vmatpush.msra.mxu0 %v495
        %727 = vmatpush.msra.mxu0 %v486
        %728 = vmatpush.msra.mxu0 %v477
        %729 = vmatpush.msra.mxu0 %v468
        %730 = vmatpush.msra.mxu0 %v459
        %731 = vmatpush.msra.mxu0 %v450
        %732 = vmatpush.msra.mxu0 %v441
        %733 = vmatpush.msra.mxu0 %v432
        %734 = vmatpush.msra.mxu0 %v423
        %735 = vmatpush.msra.mxu0 %v414
        %736 = vmatpush.msra.mxu0 %v405
        %737 = vmatpush.msra.mxu0 %v396
        %738 = vmatmul.f32.gmra.mxu0 %v539
        %v739 = vpop.f32.mrf.mxu0
        %v740 = vadd.f32 %v720, %v739
        %741 = vdwg.mxu0
        %742 = vmatpush.msra.mxu0 %v388
        %743 = vmatpush.msra.mxu0 %v379
        %744 = vmatpush.msra.mxu0 %v370
        %745 = vmatpush.msra.mxu0 %v361
        %746 = vmatpush.msra.mxu0 %v352
        %747 = vmatpush.msra.mxu0 %v343
        %748 = vmatpush.msra.mxu0 %v334
        %749 = vmatpush.msra.mxu0 %v325
        %750 = vmatpush.msra.mxu0 %v316
        %751 = vmatpush.msra.mxu0 %v307
        %752 = vmatpush.msra.mxu0 %v298
        %753 = vmatpush.msra.mxu0 %v289
        %754 = vmatpush.msra.mxu0 %v280
        %755 = vmatpush.msra.mxu0 %v271
        %756 = vmatpush.msra.mxu0 %v262
        %757 = vmatpush.msra.mxu0 %v253
        %758 = vmatmul.f32.gmra.mxu0 %v538
        %v759 = vpop.f32.mrf.mxu0
        %v760 = vadd.f32 0.0, %v759
        %761 = vdwg.mxu0
        %762 = vmatpush.msra.mxu0 %v532
        %763 = vmatpush.msra.mxu0 %v523
        %764 = vmatpush.msra.mxu0 %v514
        %765 = vmatpush.msra.mxu0 %v505
        %766 = vmatpush.msra.mxu0 %v496
        %767 = vmatpush.msra.mxu0 %v487
        %768 = vmatpush.msra.mxu0 %v478
        %769 = vmatpush.msra.mxu0 %v469
        %770 = vmatpush.msra.mxu0 %v460
        %771 = vmatpush.msra.mxu0 %v451
        %772 = vmatpush.msra.mxu0 %v442
        %773 = vmatpush.msra.mxu0 %v433
        %774 = vmatpush.msra.mxu0 %v424
        %775 = vmatpush.msra.mxu0 %v415
        %776 = vmatpush.msra.mxu0 %v406
        %777 = vmatpush.msra.mxu0 %v397
        %778 = vmatmul.f32.gmra.mxu0 %v539
        %v779 = vpop.f32.mrf.mxu0
        %v780 = vadd.f32 %v760, %v779
        %781 = vdwg.mxu0
        %782 = vmatpush.msra.mxu0 %v389
        %783 = vmatpush.msra.mxu0 %v380
        %784 = vmatpush.msra.mxu0 %v371
        %785 = vmatpush.msra.mxu0 %v362
        %786 = vmatpush.msra.mxu0 %v353
        %787 = vmatpush.msra.mxu0 %v344
        %788 = vmatpush.msra.mxu0 %v335
        %789 = vmatpush.msra.mxu0 %v326
        %790 = vmatpush.msra.mxu0 %v317
        %791 = vmatpush.msra.mxu0 %v308
        %792 = vmatpush.msra.mxu0 %v299
        %793 = vmatpush.msra.mxu0 %v290
        %794 = vmatpush.msra.mxu0 %v281
        %795 = vmatpush.msra.mxu0 %v272
        %796 = vmatpush.msra.mxu0 %v263
        %797 = vmatpush.msra.mxu0 %v254
        %798 = vmatmul.f32.gmra.mxu0 %v538
        %v799 = vpop.f32.mrf.mxu0
        %v800 = vadd.f32 0.0, %v799
        %801 = vdwg.mxu0
        %802 = vmatpush.msra.mxu0 %v533
        %803 = vmatpush.msra.mxu0 %v524
        %804 = vmatpush.msra.mxu0 %v515
        %805 = vmatpush.msra.mxu0 %v506
        %806 = vmatpush.msra.mxu0 %v497
        %807 = vmatpush.msra.mxu0 %v488
        %808 = vmatpush.msra.mxu0 %v479
        %809 = vmatpush.msra.mxu0 %v470
        %810 = vmatpush.msra.mxu0 %v461
        %811 = vmatpush.msra.mxu0 %v452
        %812 = vmatpush.msra.mxu0 %v443
        %813 = vmatpush.msra.mxu0 %v434
        %814 = vmatpush.msra.mxu0 %v425
        %815 = vmatpush.msra.mxu0 %v416
        %816 = vmatpush.msra.mxu0 %v407
        %817 = vmatpush.msra.mxu0 %v398
        %818 = vmatmul.f32.gmra.mxu0 %v539
        %v819 = vpop.f32.mrf.mxu0
        %v820 = vadd.f32 %v800, %v819
        %821 = vdwg.mxu0
        %822 = vmatpush.msra.mxu0 %v390
        %823 = vmatpush.msra.mxu0 %v381
        %824 = vmatpush.msra.mxu0 %v372
        %825 = vmatpush.msra.mxu0 %v363
        %826 = vmatpush.msra.mxu0 %v354
        %827 = vmatpush.msra.mxu0 %v345
        %828 = vmatpush.msra.mxu0 %v336
        %829 = vmatpush.msra.mxu0 %v327
        %830 = vmatpush.msra.mxu0 %v318
        %831 = vmatpush.msra.mxu0 %v309
        %832 = vmatpush.msra.mxu0 %v300
        %833 = vmatpush.msra.mxu0 %v291
        %834 = vmatpush.msra.mxu0 %v282
        %835 = vmatpush.msra.mxu0 %v273
        %836 = vmatpush.msra.mxu0 %v264
        %837 = vmatpush.msra.mxu0 %v255
        %838 = vmatmul.f32.gmra.mxu0 %v538
        %v839 = vpop.f32.mrf.mxu0
        %v840 = vadd.f32 0.0, %v839
        %841 = vdwg.mxu0
        %842 = vmatpush.msra.mxu0 %v534
        %843 = vmatpush.msra.mxu0 %v525
        %844 = vmatpush.msra.mxu0 %v516
        %845 = vmatpush.msra.mxu0 %v507
        %846 = vmatpush.msra.mxu0 %v498
        %847 = vmatpush.msra.mxu0 %v489
        %848 = vmatpush.msra.mxu0 %v480
        %849 = vmatpush.msra.mxu0 %v471
        %850 = vmatpush.msra.mxu0 %v462
        %851 = vmatpush.msra.mxu0 %v453
        %852 = vmatpush.msra.mxu0 %v444
        %853 = vmatpush.msra.mxu0 %v435
        %854 = vmatpush.msra.mxu0 %v426
        %855 = vmatpush.msra.mxu0 %v417
        %856 = vmatpush.msra.mxu0 %v408
        %857 = vmatpush.msra.mxu0 %v399
        %858 = vmatmul.f32.gmra.mxu0 %v539
        %v859 = vpop.f32.mrf.mxu0
        %v860 = vadd.f32 %v840, %v859
        %861 = vdwg.mxu0
        %862 = vmatpush.msra.mxu0 %v391
        %863 = vmatpush.msra.mxu0 %v382
        %864 = vmatpush.msra.mxu0 %v373
        %865 = vmatpush.msra.mxu0 %v364
        %866 = vmatpush.msra.mxu0 %v355
        %867 = vmatpush.msra.mxu0 %v346
        %868 = vmatpush.msra.mxu0 %v337
        %869 = vmatpush.msra.mxu0 %v328
        %870 = vmatpush.msra.mxu0 %v319
        %871 = vmatpush.msra.mxu0 %v310
        %872 = vmatpush.msra.mxu0 %v301
        %873 = vmatpush.msra.mxu0 %v292
        %874 = vmatpush.msra.mxu0 %v283
        %875 = vmatpush.msra.mxu0 %v274
        %876 = vmatpush.msra.mxu0 %v265
        %877 = vmatpush.msra.mxu0 %v256
        %878 = vmatmul.f32.gmra.mxu0 %v538
        %v879 = vpop.f32.mrf.mxu0
        %v880 = vadd.f32 0.0, %v879
        %881 = vdwg.mxu0
        %882 = vmatpush.msra.mxu0 %v535
        %883 = vmatpush.msra.mxu0 %v526
        %884 = vmatpush.msra.mxu0 %v517
        %885 = vmatpush.msra.mxu0 %v508
        %886 = vmatpush.msra.mxu0 %v499
        %887 = vmatpush.msra.mxu0 %v490
        %888 = vmatpush.msra.mxu0 %v481
        %889 = vmatpush.msra.mxu0 %v472
        %890 = vmatpush.msra.mxu0 %v463
        %891 = vmatpush.msra.mxu0 %v454
        %892 = vmatpush.msra.mxu0 %v445
        %893 = vmatpush.msra.mxu0 %v436
        %894 = vmatpush.msra.mxu0 %v427
        %895 = vmatpush.msra.mxu0 %v418
        %896 = vmatpush.msra.mxu0 %v409
        %897 = vmatpush.msra.mxu0 %v400
        %898 = vmatmul.f32.gmra.mxu0 %v539
        %v899 = vpop.f32.mrf.mxu0
        %v900 = vadd.f32 %v880, %v899
        %901 = vdwg.mxu0
        %v902 = vld [vmem:[#allocation7] sm:$0xff]
        %v903 = vld [vmem:[%s3] sm:$0xff]
        %v913 = vrot.slane %v580, 4
        %v914 = vrot.slane %v620, 4
        %v915 = vrot.slane %v660, 4
        %v916 = vrot.slane %v700, 4
        %v917 = vrot.slane %v740, 4
        %v918 = vrot.slane %v780, 4
        %v919 = vrot.slane %v820, 4
        %v920 = vrot.slane %v860, 4
        %v921 = vrot.slane %v900, 4
        %922 = vrot.lane.b32.xlu0 %v913, 127
        %v923 = vpop.permute.xlu0 %922
        %924 = vrot.lane.b32.xlu0 %v914, 127
        %v925 = vpop.permute.xlu0 %924
        %926 = vrot.lane.b32.xlu0 %v915, 127
        %v927 = vpop.permute.xlu0 %926
        %928 = vrot.lane.b32.xlu0 %v916, 127
        %v929 = vpop.permute.xlu0 %928
        %930 = vrot.lane.b32.xlu0 %v917, 127
        %v931 = vpop.permute.xlu0 %930
        %932 = vrot.lane.b32.xlu0 %v918, 127
        %v933 = vpop.permute.xlu0 %932
        %934 = vrot.lane.b32.xlu0 %v919, 127
        %v935 = vpop.permute.xlu0 %934
        %936 = vrot.lane.b32.xlu0 %v920, 127
        %v937 = vpop.permute.xlu0 %936
        %938 = vrot.lane.b32.xlu0 %v921, 127
        %v939 = vpop.permute.xlu0 %938
        %vm940 = vcmask 1039360
        %v941 = vsel %vm940, %v923, %v925
        %v942 = vsel %vm940, %v925, %v927
        %v943 = vsel %vm940, %v927, %v929
        %v944 = vsel %vm940, %v929, %v931
        %v945 = vsel %vm940, %v931, %v933
        %v946 = vsel %vm940, %v933, %v935
        %v947 = vsel %vm940, %v935, %v937
        %v948 = vsel %vm940, %v937, %v939
        %957 = vrot.lane.b32.xlu0 %v580, 126
        %v958 = vpop.permute.xlu0 %957
        %959 = vrot.lane.b32.xlu0 %v620, 126
        %v960 = vpop.permute.xlu0 %959
        %961 = vrot.lane.b32.xlu0 %v660, 126
        %v962 = vpop.permute.xlu0 %961
        %963 = vrot.lane.b32.xlu0 %v700, 126
        %v964 = vpop.permute.xlu0 %963
        %965 = vrot.lane.b32.xlu0 %v740, 126
        %v966 = vpop.permute.xlu0 %965
        %967 = vrot.lane.b32.xlu0 %v780, 126
        %v968 = vpop.permute.xlu0 %967
        %969 = vrot.lane.b32.xlu0 %v820, 126
        %v970 = vpop.permute.xlu0 %969
        %971 = vrot.lane.b32.xlu0 %v860, 126
        %v972 = vpop.permute.xlu0 %971
        %973 = vrot.lane.b32.xlu0 %v900, 126
        %v974 = vpop.permute.xlu0 %973
        %vm975 = vcmask 1031168
        %v976 = vsel %vm975, %v958, %v960
        %v977 = vsel %vm975, %v960, %v962
        %v978 = vsel %vm975, %v962, %v964
        %v979 = vsel %vm975, %v964, %v966
        %v980 = vsel %vm975, %v966, %v968
        %v981 = vsel %vm975, %v968, %v970
        %v982 = vsel %vm975, %v970, %v972
        %v983 = vsel %vm975, %v972, %v974
        %992 = vrot.lane.b32.xlu0 %v913, 96
        %v993 = vpop.permute.xlu0 %992
        %994 = vrot.lane.b32.xlu0 %v914, 96
        %v995 = vpop.permute.xlu0 %994
        %996 = vrot.lane.b32.xlu0 %v915, 96
        %v997 = vpop.permute.xlu0 %996
        %998 = vrot.lane.b32.xlu0 %v916, 96
        %v999 = vpop.permute.xlu0 %998
        %1000 = vrot.lane.b32.xlu0 %v917, 96
        %v1001 = vpop.permute.xlu0 %1000
        %1002 = vrot.lane.b32.xlu0 %v918, 96
        %v1003 = vpop.permute.xlu0 %1002
        %1004 = vrot.lane.b32.xlu0 %v919, 96
        %v1005 = vpop.permute.xlu0 %1004
        %1006 = vrot.lane.b32.xlu0 %v920, 96
        %v1007 = vpop.permute.xlu0 %1006
        %1008 = vrot.lane.b32.xlu0 %v921, 96
        %v1009 = vpop.permute.xlu0 %1008
        %vm1010 = vcmask 785408
        %v1011 = vsel %vm1010, %v993, %v995
        %v1012 = vsel %vm1010, %v995, %v997
        %v1013 = vsel %vm1010, %v997, %v999
        %v1014 = vsel %vm1010, %v999, %v1001
        %v1015 = vsel %vm1010, %v1001, %v1003
        %v1016 = vsel %vm1010, %v1003, %v1005
        %v1017 = vsel %vm1010, %v1005, %v1007
        %v1018 = vsel %vm1010, %v1007, %v1009
        %1027 = vrot.lane.b32.xlu0 %v580, 95
        %v1028 = vpop.permute.xlu0 %1027
        %1029 = vrot.lane.b32.xlu0 %v620, 95
        %v1030 = vpop.permute.xlu0 %1029
        %1031 = vrot.lane.b32.xlu0 %v660, 95
        %v1032 = vpop.permute.xlu0 %1031
        %1033 = vrot.lane.b32.xlu0 %v700, 95
        %v1034 = vpop.permute.xlu0 %1033
        %1035 = vrot.lane.b32.xlu0 %v740, 95
        %v1036 = vpop.permute.xlu0 %1035
        %1037 = vrot.lane.b32.xlu0 %v780, 95
        %v1038 = vpop.permute.xlu0 %1037
        %1039 = vrot.lane.b32.xlu0 %v820, 95
        %v1040 = vpop.permute.xlu0 %1039
        %1041 = vrot.lane.b32.xlu0 %v860, 95
        %v1042 = vpop.permute.xlu0 %1041
        %1043 = vrot.lane.b32.xlu0 %v900, 95
        %v1044 = vpop.permute.xlu0 %1043
        %vm1045 = vcmask 777216
        %v1046 = vsel %vm1045, %v1028, %v1030
        %v1047 = vsel %vm1045, %v1030, %v1032
        %v1048 = vsel %vm1045, %v1032, %v1034
        %v1049 = vsel %vm1045, %v1034, %v1036
        %v1050 = vsel %vm1045, %v1036, %v1038
        %v1051 = vsel %vm1045, %v1038, %v1040
        %v1052 = vsel %vm1045, %v1040, %v1042
        %v1053 = vsel %vm1045, %v1042, %v1044
        %1062 = vrot.lane.b32.xlu0 %v913, 94
        %v1063 = vpop.permute.xlu0 %1062
        %1064 = vrot.lane.b32.xlu0 %v914, 94
        %v1065 = vpop.permute.xlu0 %1064
        %1066 = vrot.lane.b32.xlu0 %v915, 94
        %v1067 = vpop.permute.xlu0 %1066
        %1068 = vrot.lane.b32.xlu0 %v916, 94
        %v1069 = vpop.permute.xlu0 %1068
        %1070 = vrot.lane.b32.xlu0 %v917, 94
        %v1071 = vpop.permute.xlu0 %1070
        %1072 = vrot.lane.b32.xlu0 %v918, 94
        %v1073 = vpop.permute.xlu0 %1072
        %1074 = vrot.lane.b32.xlu0 %v919, 94
        %v1075 = vpop.permute.xlu0 %1074
        %1076 = vrot.lane.b32.xlu0 %v920, 94
        %v1077 = vpop.permute.xlu0 %1076
        %1078 = vrot.lane.b32.xlu0 %v921, 94
        %v1079 = vpop.permute.xlu0 %1078
        %vm1080 = vcmask 769024
        %v1081 = vsel %vm1080, %v1063, %v1065
        %v1082 = vsel %vm1080, %v1065, %v1067
        %v1083 = vsel %vm1080, %v1067, %v1069
        %v1084 = vsel %vm1080, %v1069, %v1071
        %v1085 = vsel %vm1080, %v1071, %v1073
        %v1086 = vsel %vm1080, %v1073, %v1075
        %v1087 = vsel %vm1080, %v1075, %v1077
        %v1088 = vsel %vm1080, %v1077, %v1079
        %1097 = vrot.lane.b32.xlu0 %v580, 64
        %v1098 = vpop.permute.xlu0 %1097
        %1099 = vrot.lane.b32.xlu0 %v620, 64
        %v1100 = vpop.permute.xlu0 %1099
        %1101 = vrot.lane.b32.xlu0 %v660, 64
        %v1102 = vpop.permute.xlu0 %1101
        %1103 = vrot.lane.b32.xlu0 %v700, 64
        %v1104 = vpop.permute.xlu0 %1103
        %1105 = vrot.lane.b32.xlu0 %v740, 64
        %v1106 = vpop.permute.xlu0 %1105
        %1107 = vrot.lane.b32.xlu0 %v780, 64
        %v1108 = vpop.permute.xlu0 %1107
        %1109 = vrot.lane.b32.xlu0 %v820, 64
        %v1110 = vpop.permute.xlu0 %1109
        %1111 = vrot.lane.b32.xlu0 %v860, 64
        %v1112 = vpop.permute.xlu0 %1111
        %1113 = vrot.lane.b32.xlu0 %v900, 64
        %v1114 = vpop.permute.xlu0 %1113
        %vm1115 = vcmask 523264
        %v1116 = vsel %vm1115, %v1098, %v1100
        %v1117 = vsel %vm1115, %v1100, %v1102
        %v1118 = vsel %vm1115, %v1102, %v1104
        %v1119 = vsel %vm1115, %v1104, %v1106
        %v1120 = vsel %vm1115, %v1106, %v1108
        %v1121 = vsel %vm1115, %v1108, %v1110
        %v1122 = vsel %vm1115, %v1110, %v1112
        %v1123 = vsel %vm1115, %v1112, %v1114
        %1132 = vrot.lane.b32.xlu0 %v913, 63
        %v1133 = vpop.permute.xlu0 %1132
        %1134 = vrot.lane.b32.xlu0 %v914, 63
        %v1135 = vpop.permute.xlu0 %1134
        %1136 = vrot.lane.b32.xlu0 %v915, 63
        %v1137 = vpop.permute.xlu0 %1136
        %1138 = vrot.lane.b32.xlu0 %v916, 63
        %v1139 = vpop.permute.xlu0 %1138
        %1140 = vrot.lane.b32.xlu0 %v917, 63
        %v1141 = vpop.permute.xlu0 %1140
        %1142 = vrot.lane.b32.xlu0 %v918, 63
        %v1143 = vpop.permute.xlu0 %1142
        %1144 = vrot.lane.b32.xlu0 %v919, 63
        %v1145 = vpop.permute.xlu0 %1144
        %1146 = vrot.lane.b32.xlu0 %v920, 63
        %v1147 = vpop.permute.xlu0 %1146
        %1148 = vrot.lane.b32.xlu0 %v921, 63
        %v1149 = vpop.permute.xlu0 %1148
        %vm1150 = vcmask 515072
        %v1151 = vsel %vm1150, %v1133, %v1135
        %v1152 = vsel %vm1150, %v1135, %v1137
        %v1153 = vsel %vm1150, %v1137, %v1139
        %v1154 = vsel %vm1150, %v1139, %v1141
        %v1155 = vsel %vm1150, %v1141, %v1143
        %v1156 = vsel %vm1150, %v1143, %v1145
        %v1157 = vsel %vm1150, %v1145, %v1147
        %v1158 = vsel %vm1150, %v1147, %v1149
        %1167 = vrot.lane.b32.xlu0 %v580, 62
        %v1168 = vpop.permute.xlu0 %1167
        %1169 = vrot.lane.b32.xlu0 %v620, 62
        %v1170 = vpop.permute.xlu0 %1169
        %1171 = vrot.lane.b32.xlu0 %v660, 62
        %v1172 = vpop.permute.xlu0 %1171
        %1173 = vrot.lane.b32.xlu0 %v700, 62
        %v1174 = vpop.permute.xlu0 %1173
        %1175 = vrot.lane.b32.xlu0 %v740, 62
        %v1176 = vpop.permute.xlu0 %1175
        %1177 = vrot.lane.b32.xlu0 %v780, 62
        %v1178 = vpop.permute.xlu0 %1177
        %1179 = vrot.lane.b32.xlu0 %v820, 62
        %v1180 = vpop.permute.xlu0 %1179
        %1181 = vrot.lane.b32.xlu0 %v860, 62
        %v1182 = vpop.permute.xlu0 %1181
        %1183 = vrot.lane.b32.xlu0 %v900, 62
        %v1184 = vpop.permute.xlu0 %1183
        %vm1185 = vcmask 506880
        %v1186 = vsel %vm1185, %v1168, %v1170
        %v1187 = vsel %vm1185, %v1170, %v1172
        %v1188 = vsel %vm1185, %v1172, %v1174
        %v1189 = vsel %vm1185, %v1174, %v1176
        %v1190 = vsel %vm1185, %v1176, %v1178
        %v1191 = vsel %vm1185, %v1178, %v1180
        %v1192 = vsel %vm1185, %v1180, %v1182
        %v1193 = vsel %vm1185, %v1182, %v1184
        %vm1194 = vcmask 1043456
        %v1195 = vsel %vm1194, %v580, %v941
        %v1196 = vsel %vm1194, %v620, %v942
        %v1197 = vsel %vm1194, %v660, %v943
        %v1198 = vsel %vm1194, %v700, %v944
        %v1199 = vsel %vm1194, %v740, %v945
        %v1200 = vsel %vm1194, %v780, %v946
        %v1201 = vsel %vm1194, %v820, %v947
        %v1202 = vsel %vm1194, %v860, %v948
        %v1203 = vsel %vm1194, %v976, %v1011
        %v1204 = vsel %vm1194, %v977, %v1012
        %v1205 = vsel %vm1194, %v978, %v1013
        %v1206 = vsel %vm1194, %v979, %v1014
        %v1207 = vsel %vm1194, %v980, %v1015
        %v1208 = vsel %vm1194, %v981, %v1016
        %v1209 = vsel %vm1194, %v982, %v1017
        %v1210 = vsel %vm1194, %v983, %v1018
        %v1211 = vsel %vm1194, %v1046, %v1081
        %v1212 = vsel %vm1194, %v1047, %v1082
        %v1213 = vsel %vm1194, %v1048, %v1083
        %v1214 = vsel %vm1194, %v1049, %v1084
        %v1215 = vsel %vm1194, %v1050, %v1085
        %v1216 = vsel %vm1194, %v1051, %v1086
        %v1217 = vsel %vm1194, %v1052, %v1087
        %v1218 = vsel %vm1194, %v1053, %v1088
        %v1219 = vsel %vm1194, %v1116, %v1151
        %v1220 = vsel %vm1194, %v1117, %v1152
        %v1221 = vsel %vm1194, %v1118, %v1153
        %v1222 = vsel %vm1194, %v1119, %v1154
        %v1223 = vsel %vm1194, %v1120, %v1155
        %v1224 = vsel %vm1194, %v1121, %v1156
        %v1225 = vsel %vm1194, %v1122, %v1157
        %v1226 = vsel %vm1194, %v1123, %v1158
        %1228 = vset.pattern.permute.xlu0 0
        %1229 = vperm.xlu0 %1228, %v903
        %v1230 = vpop.permute.xlu0 %1229
        %vm1232 = vcmask 293888
        %v1234 = vsel %vm1232, %v902, 0
        %v1236 = vsel %vm1194, %v1186, 0
        %v1238 = vsel %vm1194, %v1187, 0
        %v1240 = vsel %vm1194, %v1188, 0
        %v1242 = vsel %vm1194, %v1189, 0
        %v1244 = vsel %vm1194, %v1190, 0
        %v1246 = vsel %vm1194, %v1191, 0
        %v1248 = vsel %vm1194, %v1192, 0
        %v1250 = vsel %vm1194, %v1193, 0
        %1252 = vmatpush.msra.mxu0 0.0
        %1253 = vmatpush.msra.mxu0 0.0
        %1254 = vmatpush.msra.mxu0 0.0
        %1255 = vmatpush.msra.mxu0 0.0
        %1256 = vmatpush.msra.mxu0 0.0
        %1257 = vmatpush.msra.mxu0 0.0
        %1258 = vmatpush.msra.mxu0 0.0
        %1259 = vmatpush.msra.mxu0 0.0
        %1260 = vmatpush.msra.mxu0 0.0
        %1261 = vmatpush.msra.mxu0 0.0
        %1262 = vmatpush.msra.mxu0 0.0
        %1263 = vmatpush.msra.mxu0 %v1236
        %1264 = vmatpush.msra.mxu0 %v1219
        %1265 = vmatpush.msra.mxu0 %v1211
        %1266 = vmatpush.msra.mxu0 %v1203
        %1267 = vmatpush.msra.mxu0 %v1195
        %1268 = vmatmul.f32.gmra.mxu0 %v1234
        %v1269 = vpop.f32.mrf.mxu0
        %v1270 = vadd.f32 %v1230, %v1269
        %1271 = vdwg.mxu0
        %1272 = vmatpush.msra.mxu0 0.0
        %1273 = vmatpush.msra.mxu0 0.0
        %1274 = vmatpush.msra.mxu0 0.0
        %1275 = vmatpush.msra.mxu0 0.0
        %1276 = vmatpush.msra.mxu0 0.0
        %1277 = vmatpush.msra.mxu0 0.0
        %1278 = vmatpush.msra.mxu0 0.0
        %1279 = vmatpush.msra.mxu0 0.0
        %1280 = vmatpush.msra.mxu0 0.0
        %1281 = vmatpush.msra.mxu0 0.0
        %1282 = vmatpush.msra.mxu0 0.0
        %1283 = vmatpush.msra.mxu0 %v1238
        %1284 = vmatpush.msra.mxu0 %v1220
        %1285 = vmatpush.msra.mxu0 %v1212
        %1286 = vmatpush.msra.mxu0 %v1204
        %1287 = vmatpush.msra.mxu0 %v1196
        %1288 = vmatmul.f32.gmra.mxu0 %v1234
        %v1289 = vpop.f32.mrf.mxu0
        %v1290 = vadd.f32 %v1230, %v1289
        %1291 = vdwg.mxu0
        %1292 = vmatpush.msra.mxu0 0.0
        %1293 = vmatpush.msra.mxu0 0.0
        %1294 = vmatpush.msra.mxu0 0.0
        %1295 = vmatpush.msra.mxu0 0.0
        %1296 = vmatpush.msra.mxu0 0.0
        %1297 = vmatpush.msra.mxu0 0.0
        %1298 = vmatpush.msra.mxu0 0.0
        %1299 = vmatpush.msra.mxu0 0.0
        %1300 = vmatpush.msra.mxu0 0.0
        %1301 = vmatpush.msra.mxu0 0.0
        %1302 = vmatpush.msra.mxu0 0.0
        %1303 = vmatpush.msra.mxu0 %v1240
        %1304 = vmatpush.msra.mxu0 %v1221
        %1305 = vmatpush.msra.mxu0 %v1213
        %1306 = vmatpush.msra.mxu0 %v1205
        %1307 = vmatpush.msra.mxu0 %v1197
        %1308 = vmatmul.f32.gmra.mxu0 %v1234
        %v1309 = vpop.f32.mrf.mxu0
        %v1310 = vadd.f32 %v1230, %v1309
        %1311 = vdwg.mxu0
        %1312 = vmatpush.msra.mxu0 0.0
        %1313 = vmatpush.msra.mxu0 0.0
        %1314 = vmatpush.msra.mxu0 0.0
        %1315 = vmatpush.msra.mxu0 0.0
        %1316 = vmatpush.msra.mxu0 0.0
        %1317 = vmatpush.msra.mxu0 0.0
        %1318 = vmatpush.msra.mxu0 0.0
        %1319 = vmatpush.msra.mxu0 0.0
        %1320 = vmatpush.msra.mxu0 0.0
        %1321 = vmatpush.msra.mxu0 0.0
        %1322 = vmatpush.msra.mxu0 0.0
        %1323 = vmatpush.msra.mxu0 %v1242
        %1324 = vmatpush.msra.mxu0 %v1222
        %1325 = vmatpush.msra.mxu0 %v1214
        %1326 = vmatpush.msra.mxu0 %v1206
        %1327 = vmatpush.msra.mxu0 %v1198
        %1328 = vmatmul.f32.gmra.mxu0 %v1234
        %v1329 = vpop.f32.mrf.mxu0
        %v1330 = vadd.f32 %v1230, %v1329
        %1331 = vdwg.mxu0
        %1332 = vmatpush.msra.mxu0 0.0
        %1333 = vmatpush.msra.mxu0 0.0
        %1334 = vmatpush.msra.mxu0 0.0
        %1335 = vmatpush.msra.mxu0 0.0
        %1336 = vmatpush.msra.mxu0 0.0
        %1337 = vmatpush.msra.mxu0 0.0
        %1338 = vmatpush.msra.mxu0 0.0
        %1339 = vmatpush.msra.mxu0 0.0
        %1340 = vmatpush.msra.mxu0 0.0
        %1341 = vmatpush.msra.mxu0 0.0
        %1342 = vmatpush.msra.mxu0 0.0
        %1343 = vmatpush.msra.mxu0 %v1244
        %1344 = vmatpush.msra.mxu0 %v1223
        %1345 = vmatpush.msra.mxu0 %v1215
        %1346 = vmatpush.msra.mxu0 %v1207
        %1347 = vmatpush.msra.mxu0 %v1199
        %1348 = vmatmul.f32.gmra.mxu0 %v1234
        %v1349 = vpop.f32.mrf.mxu0
        %v1350 = vadd.f32 %v1230, %v1349
        %1351 = vdwg.mxu0
        %1352 = vmatpush.msra.mxu0 0.0
        %1353 = vmatpush.msra.mxu0 0.0
        %1354 = vmatpush.msra.mxu0 0.0
        %1355 = vmatpush.msra.mxu0 0.0
        %1356 = vmatpush.msra.mxu0 0.0
        %1357 = vmatpush.msra.mxu0 0.0
        %1358 = vmatpush.msra.mxu0 0.0
        %1359 = vmatpush.msra.mxu0 0.0
        %1360 = vmatpush.msra.mxu0 0.0
        %1361 = vmatpush.msra.mxu0 0.0
        %1362 = vmatpush.msra.mxu0 0.0
        %1363 = vmatpush.msra.mxu0 %v1246
        %1364 = vmatpush.msra.mxu0 %v1224
        %1365 = vmatpush.msra.mxu0 %v1216
        %1366 = vmatpush.msra.mxu0 %v1208
        %1367 = vmatpush.msra.mxu0 %v1200
        %1368 = vmatmul.f32.gmra.mxu0 %v1234
        %v1369 = vpop.f32.mrf.mxu0
        %v1370 = vadd.f32 %v1230, %v1369
        %1371 = vdwg.mxu0
        %1372 = vmatpush.msra.mxu0 0.0
        %1373 = vmatpush.msra.mxu0 0.0
        %1374 = vmatpush.msra.mxu0 0.0
        %1375 = vmatpush.msra.mxu0 0.0
        %1376 = vmatpush.msra.mxu0 0.0
        %1377 = vmatpush.msra.mxu0 0.0
        %1378 = vmatpush.msra.mxu0 0.0
        %1379 = vmatpush.msra.mxu0 0.0
        %1380 = vmatpush.msra.mxu0 0.0
        %1381 = vmatpush.msra.mxu0 0.0
        %1382 = vmatpush.msra.mxu0 0.0
        %1383 = vmatpush.msra.mxu0 %v1248
        %1384 = vmatpush.msra.mxu0 %v1225
        %1385 = vmatpush.msra.mxu0 %v1217
        %1386 = vmatpush.msra.mxu0 %v1209
        %1387 = vmatpush.msra.mxu0 %v1201
        %1388 = vmatmul.f32.gmra.mxu0 %v1234
        %v1389 = vpop.f32.mrf.mxu0
        %v1390 = vadd.f32 %v1230, %v1389
        %1391 = vdwg.mxu0
        %1392 = vmatpush.msra.mxu0 0.0
        %1393 = vmatpush.msra.mxu0 0.0
        %1394 = vmatpush.msra.mxu0 0.0
        %1395 = vmatpush.msra.mxu0 0.0
        %1396 = vmatpush.msra.mxu0 0.0
        %1397 = vmatpush.msra.mxu0 0.0
        %1398 = vmatpush.msra.mxu0 0.0
        %1399 = vmatpush.msra.mxu0 0.0
        %1400 = vmatpush.msra.mxu0 0.0
        %1401 = vmatpush.msra.mxu0 0.0
        %1402 = vmatpush.msra.mxu0 0.0
        %1403 = vmatpush.msra.mxu0 %v1250
        %1404 = vmatpush.msra.mxu0 %v1226
        %1405 = vmatpush.msra.mxu0 %v1218
        %1406 = vmatpush.msra.mxu0 %v1210
        %1407 = vmatpush.msra.mxu0 %v1202
        %1408 = vmatmul.f32.gmra.mxu0 %v1234
        %v1409 = vpop.f32.mrf.mxu0
        %v1410 = vadd.f32 %v1230, %v1409
        %1411 = vdwg.mxu0
        %1412 = vst [vmem:[%s246] sm:$0xff] %v1270
        %1413 = vst [vmem:[%s246 + $0x8] sm:$0xff] %v1290
        %1414 = vst [vmem:[%s246 + $0x10] sm:$0xff] %v1310
        %1415 = vst [vmem:[%s246 + $0x18] sm:$0xff] %v1330
        %1416 = vst [vmem:[%s246 + $0x20] sm:$0xff] %v1350
        %1417 = vst [vmem:[%s246 + $0x28] sm:$0xff] %v1370
        %1418 = vst [vmem:[%s246 + $0x30] sm:$0xff] %v1390
        %1419 = vst [vmem:[%s246 + $0x38] sm:$0xff] %v1410
        %s1420 = sand.u32 %s119, 1
        %s1421 = scalar_lea.sflag [#allocation4], %s1420
        %s1422 = sand.u32 %s119, 1
        %s1423 = smul.addr %s1422, 64
        %s1424 = scalar_lea.vmem [#allocation8], %s1423
        // Predicated region
        $region49: #{tpu_custom_call.1} parent=35 // pred_check
          %p1425 = pneg %p129
        $region50: #{tpu_custom_call.1} parent=35 // pred_check_branch
          %1427 = sbr.rel (%p1425) target = $region52
        $region51: #{tpu_custom_call.1} parent=35 // pred_region
          %1429 = vsyncadd %s1421, 0
          %s1430 = smul.addr %s22, 8
          %s1431 = smul.addr %s1430, 8
          %s1432 = scalar_lea.hbm %s4, %s1431
          %s1434 = sshll.u32 %s1424, 4
          %s1435 = int_to_ptr.vmem [resolvable:$true] %s1434
          %s1436 = sshll.u32 %s1432, 4
          %s1437 = int_to_ptr.hbm [resolvable:$true] %s1436
          %1439 = dma.vmem_to_hbm [thread:$0]  %s1435, 1024, %s1437, %s1421
        $region52: #{tpu_custom_call.1} parent=35 // pred_fallthru
          _
      $region36: #{tpu_custom_call.1} parent=5 // pred_fallthru
        _
      %p1440 = scmp.le.s32.totalorder 2, %s17
      // Predicated region
      $region53: #{tpu_custom_call.1} parent=5 // pred_check
        %p1441 = pneg %p1440
      $region54: #{tpu_custom_call.1} parent=5 // pred_check_branch
        %1443 = sbr.rel (%p1441) target = $region56
      $region55: #{tpu_custom_call.1} parent=5 // pred_region
        %s1444 = ssub.s32 %s17, 2
        // Predicated region
        $region57: #{tpu_custom_call.1} parent=55 // pred_check
          %p1445 = pneg %p135
        $region58: #{tpu_custom_call.1} parent=55 // pred_check_branch
          %1447 = sbr.rel (%p1445) target = $region60
        $region59: #{tpu_custom_call.1} parent=55 // pred_region
          %s1448 = sand.u32 %s120, 1
          %s1449 = scalar_lea.sflag [#allocation4], %s1448
          %s1450 = sand.u32 %s120, 1
          %s1451 = smul.addr %s1450, 64
          %s1452 = scalar_lea.vmem [#allocation8], %s1451
          %1454 = dma.done %s1449, 1024
        $region60: #{tpu_custom_call.1} parent=55 // pred_fallthru
          _
      $region56: #{tpu_custom_call.1} parent=5 // pred_fallthru
        _
    $region6: #{tpu_custom_call.1} parent=1 // loop_footer
      %s21 = sadd.s32 1, %s17
    $region7: #{tpu_custom_call.1} parent=1 // loop_footer_branch
      %16 = sbr.rel target = $region3
    $region8: #{tpu_custom_call.1} parent=1 // loop_exit
      _
    %1455 = vsyncpa [#allocation3], 1
    %s1456 = scalar_lea.sflag [#allocation3], 1
    %1457 = vsyncpa %s1456, 1
    %1458 = vsyncpa [#allocation6], 1
    %1459 = vsyncpa [#allocation4], 1
    %s1460 = scalar_lea.sflag [#allocation4], 1
    %1461 = vsyncpa %s1460, 1

</llo_original>
